<compile_context>
chip_gen: v7x
topology: tpu7x:2x2x1
jax: 0.10.0
libtpu: 0.0.40
codegen_flags: <defaults>
</compile_context>

<pallas_src>
import numpy as np
import jax
import jax.numpy as jnp
from jax.experimental import pallas as pl
from jax.experimental.pallas import tpu as pltpu


def _round_up(x, m):
    return ((x + m - 1) // m) * m


# ----------------------------------------------------------------------------
# Conv (transposed im2col matmul) + bias + ReLU:
#   o(N, TM) = relu( W(N, K) @ P(K, TM) + b(N, 1) )
# ----------------------------------------------------------------------------
def _conv_matmul_kernel(w_ref, b_ref, p_ref, o_ref):
    # f32 operands, f32 accumulate.  Pass precision=jax.lax.Precision.HIGHEST
    # here if strict fp32 parity with the PyTorch reference is required.
    acc = jnp.dot(w_ref[...], p_ref[...], preferred_element_type=jnp.float32)
    o_ref[...] = jnp.maximum(acc + b_ref[...], 0.0)        # fused bias + ReLU


def conv2d_relu_pallas(x_cbhw, w, b, stride, pad):
    """3x3 conv + ReLU.  x: (C_in, B, H, W);  w: (C_out, C_in*9);  b: (C_out,)."""
    C, B, H, W = x_cbhw.shape
    N, K = w.shape
    kh = kw = 3
    assert K == C * kh * kw
    Ho = (H + 2 * pad - kh) // stride + 1
    Wo = (W + 2 * pad - kw) // stride + 1

    # im2col glue (host-side JAX, pure layout plumbing): K ends up on sublanes,
    # M = B*Ho*Wo on lanes.
    xp = jnp.pad(x_cbhw, ((0, 0), (0, 0), (pad, pad), (pad, pad)))
    cols = [xp[:, :, i:i + stride * Ho:stride, j:j + stride * Wo:stride]
            for i in range(kh) for j in range(kw)]
    patches = jnp.stack(cols, axis=1)                      # (C, 9, B, Ho, Wo)
    M = B * Ho * Wo
    patches = patches.reshape(K, M)                        # (K, M), M lane-dense

    TM = min(2048, _round_up(M, 128))                      # lane tile, mult of 128
    M_pad = _round_up(M, TM)
    if M_pad != M:
        patches = jnp.pad(patches, ((0, 0), (0, M_pad - M)))

    out = pl.pallas_call(
        _conv_matmul_kernel,
        out_shape=jax.ShapeDtypeStruct((N, M_pad), jnp.float32),
        grid_spec=pltpu.PrefetchScalarGridSpec(
            num_scalar_prefetch=0,
            grid=(M_pad // TM,),
            in_specs=[
                pl.BlockSpec((N, K), lambda i: (0, 0)),     # weights: VMEM-resident
                pl.BlockSpec((N, 1), lambda i: (0, 0)),     # bias:    VMEM-resident
                pl.BlockSpec((K, TM), lambda i: (0, i)),    # patches: tiled over M
            ],
            out_specs=pl.BlockSpec((N, TM), lambda i: (0, i)),
        ),
        compiler_params=pltpu.CompilerParams(dimension_semantics=("parallel",)),
        cost_estimate=pl.CostEstimate(
            flops=2 * M_pad * K * N,
            transcendentals=0,
            bytes_accessed=4 * (K * M_pad + N * K + N + N * M_pad)),
    )(w, b.reshape(N, 1), patches)

    return out[:, :M].reshape(N, B, Ho, Wo)                # stay channels-leading


# ----------------------------------------------------------------------------
# Bilinear x4 upsample (align_corners=False), TC planes per grid step:
#   out_plane = Wh @ x_plane @ Ww^T   (two MXU matmuls per plane)
# ----------------------------------------------------------------------------
def _bilinear_matrix(in_size, out_size):
    # PyTorch bilinear, align_corners=False: src = (o + 0.5)*in/out - 0.5, clamped at 0.
    scale = in_size / out_size
    o = np.arange(out_size)
    src = np.maximum((o + 0.5) * scale - 0.5, 0.0)
    i0 = np.minimum(np.floor(src).astype(np.int64), in_size - 1)
    i1 = np.minimum(i0 + 1, in_size - 1)
    lam = src - i0
    Wm = np.zeros((out_size, in_size), dtype=np.float32)
    Wm[np.arange(out_size), i0] += (1.0 - lam)
    Wm[np.arange(out_size), i1] += lam
    return jnp.asarray(Wm)


def _make_upsample_kernel(tc):
    def kernel(x_ref, wh_ref, wwT_ref, o_ref):
        wh = wh_ref[...]
        wwT = wwT_ref[...]
        for p in range(tc):                                # static unroll, tc planes/step
            t = jnp.dot(wh, x_ref[p, 0], preferred_element_type=jnp.float32)
            o_ref[0, p] = jnp.dot(t, wwT, preferred_element_type=jnp.float32)
    return kernel


def bilinear_upsample4_pallas(x_cbhw):
    """x: (C, B, Hin, Win) -> (B, C, 4*Hin, 4*Win); NCHW permute folded into out_spec."""
    C, B, Hin, Win = x_cbhw.shape
    Hout, Wout = 4 * Hin, 4 * Win
    Wh = _bilinear_matrix(Hin, Hout)                       # (Hout, Hin)
    WwT = _bilinear_matrix(Win, Wout).T                    # (Win, Wout)

    # Batch TC channel planes per grid step while keeping the double-buffered
    # block footprint small even on v7x's reduced VMEM.
    budget = 4 * 1024 * 1024
    per_plane = 4 * (Hin * Win + Hout * Wout)
    tc = 1
    for d in range(1, C + 1):
        if C % d == 0 and d * per_plane <= budget:
            tc = d
    # NOTE: for very large single planes the output should additionally be
    # tiled over Hout; not needed at these feature-map sizes.

    out = pl.pallas_call(
        _make_upsample_kernel(tc),
        out_shape=jax.ShapeDtypeStruct((B, C, Hout, Wout), jnp.float32),
        grid_spec=pltpu.PrefetchScalarGridSpec(
            num_scalar_prefetch=0,
            grid=(C // tc, B),
            in_specs=[
                pl.BlockSpec((tc, 1, Hin, Win), lambda ci, b: (ci, b, 0, 0)),
                pl.BlockSpec((Hout, Hin), lambda ci, b: (0, 0)),
                pl.BlockSpec((Win, Wout), lambda ci, b: (0, 0)),
            ],
            out_specs=pl.BlockSpec((1, tc, Hout, Wout), lambda ci, b: (b, ci, 0, 0)),
        ),
        compiler_params=pltpu.CompilerParams(
            dimension_semantics=("parallel", "parallel")),
        cost_estimate=pl.CostEstimate(
            flops=2 * C * B * (Hout * Hin * Win + Hout * Win * Wout),
            transcendentals=0,
            bytes_accessed=4 * (C * B * Hin * Win + Hout * Hin + Win * Wout
                                + B * C * Hout * Wout)),
    )(x_cbhw, Wh, WwT)
    return out


# ----------------------------------------------------------------------------
# SegmentationNet forward: base_network (stand-in upconv-resnet, outputs at
# 1/4 resolution) followed by nn.Upsample(scale_factor=4, mode='bilinear').
# ----------------------------------------------------------------------------
def segmentation_net_forward(x, params):
    # x: NCHW. One cheap transpose to channels-leading; everything after stays
    # in (C, B, H, W) until the upsample writes NCHW directly.
    xc = jnp.transpose(x, (1, 0, 2, 3))
    f = conv2d_relu_pallas(xc, params["w1"], params["b1"], stride=2, pad=1)
    f = conv2d_relu_pallas(f, params["w2"], params["b2"], stride=2, pad=1)
    return bilinear_upsample4_pallas(f)


def init_params(key, c_in=3, c_mid=8, c_out=8):
    k1, k2, k3, k4 = jax.random.split(key, 4)
    return {
        # weights stored (C_out, C_in*3*3) to match the transposed matmul
        "w1": jax.random.normal(k1, (c_mid, c_in * 9), jnp.float32) * 0.1,
        "b1": jax.random.normal(k2, (c_mid,), jnp.float32) * 0.01,
        "w2": jax.random.normal(k3, (c_out, c_mid * 9), jnp.float32) * 0.1,
        "b2": jax.random.normal(k4, (c_out,), jnp.float32) * 0.01,
    }


if __name__ == "__main__":
    key = jax.random.PRNGKey(0)
    kx, kp = jax.random.split(key)
    # input_frame_number=1 -> 3 input channels (NCHW), small spatial size.
    x = jax.random.normal(kx, (2, 3, 16, 16), jnp.float32)
    params = init_params(kp)

    out = jax.block_until_ready(jax.jit(segmentation_net_forward)(x, params))

    assert out.shape == (2, 8, 16, 16), out.shape
    assert out.dtype == jnp.float32
    assert bool(jnp.all(jnp.isfinite(out)))
    print("KERNEL_OK")
</pallas_src>

<mosaic_0001>
module attributes {stable_mosaic.version = 11 : i64} {
  func.func @_conv_matmul_kernel(%arg0: i32, %arg1: memref<8x27xf32, #tpu.memory_space<vmem>>, %arg2: memref<8x1xf32, #tpu.memory_space<vmem>>, %arg3: memref<27x128xf32, #tpu.memory_space<vmem>>, %arg4: memref<8x128xf32, #tpu.memory_space<vmem>>) attributes {dimension_semantics = [#tpu.dimension_semantics<parallel>], iteration_bounds = array<i64: 1>, scalar_prefetch = 0 : i64, scratch_operands = 0 : i64, tpu.core_type = #tpu.core_type<tc>, window_params = [{pipeline_mode = #tpu.pipeline_mode<synchronous>, transform_indices = @transform_0, window_bounds = array<i64: 8, 27>}, {pipeline_mode = #tpu.pipeline_mode<synchronous>, transform_indices = @transform_1, window_bounds = array<i64: 8, 1>}, {transform_indices = @transform_2, window_bounds = array<i64: 27, 128>}, {transform_indices = @transform_3, window_bounds = array<i64: 8, 128>}]} {
    %c0 = arith.constant 0 : index
    %c0_0 = arith.constant 0 : index
    %0 = vector.load %arg1[%c0, %c0_0] : memref<8x27xf32, #tpu.memory_space<vmem>>, vector<8x27xf32>
    %c0_1 = arith.constant 0 : index
    %c0_2 = arith.constant 0 : index
    %1 = vector.load %arg3[%c0_1, %c0_2] : memref<27x128xf32, #tpu.memory_space<vmem>>, vector<27x128xf32>
    %cst = arith.constant dense<0.000000e+00> : vector<8x128xf32>
    %2 = tpu.matmul %0, %1, %cst {dimension_numbers = #tpu.dot_dimension_numbers<[1], [0], [0], [1], [0, 0, 1, 1], [], []>} : vector<8x27xf32>, vector<27x128xf32>, vector<8x128xf32> -> vector<8x128xf32>
    %c0_3 = arith.constant 0 : index
    %c0_4 = arith.constant 0 : index
    %3 = vector.load %arg2[%c0_3, %c0_4] : memref<8x1xf32, #tpu.memory_space<vmem>>, vector<8x1xf32>
    %4 = vector.broadcast %3 : vector<8x1xf32> to vector<8x128xf32>
    %5 = arith.addf %2, %4 : vector<8x128xf32>
    %cst_5 = arith.constant 0.000000e+00 : f32
    %6 = vector.broadcast %cst_5 : f32 to vector<8x128xf32>
    %7 = arith.maximumf %5, %6 : vector<8x128xf32>
    %c0_6 = arith.constant 0 : index
    %c0_7 = arith.constant 0 : index
    %8 = vector.load %arg4[%c0_6, %c0_7] : memref<8x128xf32, #tpu.memory_space<vmem>>, vector<8x128xf32>
    tpu.vector_store %arg4[%c0_6, %c0_7], %7 {strides = array<i32>} : memref<8x128xf32, #tpu.memory_space<vmem>>, vector<8x128xf32>,
    return
  }
  func.func @transform_0(%arg0: i32) -> (i32, i32) {
    %c0_i32 = arith.constant 0 : i32
    %c0_i32_0 = arith.constant 0 : i32
    %c0_i32_1 = arith.constant 0 : i32
    return %c0_i32, %c0_i32_0 : i32, i32
  }
  func.func @transform_1(%arg0: i32) -> (i32, i32) {
    %c0_i32 = arith.constant 0 : i32
    %c0_i32_0 = arith.constant 0 : i32
    %c0_i32_1 = arith.constant 0 : i32
    return %c0_i32, %c0_i32_0 : i32, i32
  }
  func.func @transform_2(%arg0: i32) -> (i32, i32) {
    %c0_i32 = arith.constant 0 : i32
    %c0_i32_0 = arith.constant 0 : i32
    return %c0_i32, %arg0 : i32, i32
  }
  func.func @transform_3(%arg0: i32) -> (i32, i32) {
    %c0_i32 = arith.constant 0 : i32
    %c0_i32_0 = arith.constant 0 : i32
    return %c0_i32, %arg0 : i32, i32
  }
}

module attributes {stable_mosaic.version = 11 : i64} {
  func.func @_conv_matmul_kernel(%arg0: i32, %arg1: memref<8x72xf32, #tpu.memory_space<vmem>>, %arg2: memref<8x1xf32, #tpu.memory_space<vmem>>, %arg3: memref<72x128xf32, #tpu.memory_space<vmem>>, %arg4: memref<8x128xf32, #tpu.memory_space<vmem>>) attributes {dimension_semantics = [#tpu.dimension_semantics<parallel>], iteration_bounds = array<i64: 1>, scalar_prefetch = 0 : i64, scratch_operands = 0 : i64, tpu.core_type = #tpu.core_type<tc>, window_params = [{pipeline_mode = #tpu.pipeline_mode<synchronous>, transform_indices = @transform_0, window_bounds = array<i64: 8, 72>}, {pipeline_mode = #tpu.pipeline_mode<synchronous>, transform_indices = @transform_1, window_bounds = array<i64: 8, 1>}, {transform_indices = @transform_2, window_bounds = array<i64: 72, 128>}, {transform_indices = @transform_3, window_bounds = array<i64: 8, 128>}]} {
    %c0 = arith.constant 0 : index
    %c0_0 = arith.constant 0 : index
    %0 = vector.load %arg1[%c0, %c0_0] : memref<8x72xf32, #tpu.memory_space<vmem>>, vector<8x72xf32>
    %c0_1 = arith.constant 0 : index
    %c0_2 = arith.constant 0 : index
    %1 = vector.load %arg3[%c0_1, %c0_2] : memref<72x128xf32, #tpu.memory_space<vmem>>, vector<72x128xf32>
    %cst = arith.constant dense<0.000000e+00> : vector<8x128xf32>
    %2 = tpu.matmul %0, %1, %cst {dimension_numbers = #tpu.dot_dimension_numbers<[1], [0], [0], [1], [0, 0, 1, 1], [], []>} : vector<8x72xf32>, vector<72x128xf32>, vector<8x128xf32> -> vector<8x128xf32>
    %c0_3 = arith.constant 0 : index
    %c0_4 = arith.constant 0 : index
    %3 = vector.load %arg2[%c0_3, %c0_4] : memref<8x1xf32, #tpu.memory_space<vmem>>, vector<8x1xf32>
    %4 = vector.broadcast %3 : vector<8x1xf32> to vector<8x128xf32>
    %5 = arith.addf %2, %4 : vector<8x128xf32>
    %cst_5 = arith.constant 0.000000e+00 : f32
    %6 = vector.broadcast %cst_5 : f32 to vector<8x128xf32>
    %7 = arith.maximumf %5, %6 : vector<8x128xf32>
    %c0_6 = arith.constant 0 : index
    %c0_7 = arith.constant 0 : index
    %8 = vector.load %arg4[%c0_6, %c0_7] : memref<8x128xf32, #tpu.memory_space<vmem>>, vector<8x128xf32>
    tpu.vector_store %arg4[%c0_6, %c0_7], %7 {strides = array<i32>} : memref<8x128xf32, #tpu.memory_space<vmem>>, vector<8x128xf32>,
    return
  }
  func.func @transform_0(%arg0: i32) -> (i32, i32) {
    %c0_i32 = arith.constant 0 : i32
    %c0_i32_0 = arith.constant 0 : i32
    %c0_i32_1 = arith.constant 0 : i32
    return %c0_i32, %c0_i32_0 : i32, i32
  }
  func.func @transform_1(%arg0: i32) -> (i32, i32) {
    %c0_i32 = arith.constant 0 : i32
    %c0_i32_0 = arith.constant 0 : i32
    %c0_i32_1 = arith.constant 0 : i32
    return %c0_i32, %c0_i32_0 : i32, i32
  }
  func.func @transform_2(%arg0: i32) -> (i32, i32) {
    %c0_i32 = arith.constant 0 : i32
    %c0_i32_0 = arith.constant 0 : i32
    return %c0_i32, %arg0 : i32, i32
  }
  func.func @transform_3(%arg0: i32) -> (i32, i32) {
    %c0_i32 = arith.constant 0 : i32
    %c0_i32_0 = arith.constant 0 : i32
    return %c0_i32, %arg0 : i32, i32
  }
}

module attributes {stable_mosaic.version = 11 : i64} {
  func.func @kernel(%arg0: i32, %arg1: i32, %arg2: memref<8x1x4x4xf32, #tpu.memory_space<vmem>>, %arg3: memref<16x4xf32, #tpu.memory_space<vmem>>, %arg4: memref<4x16xf32, #tpu.memory_space<vmem>>, %arg5: memref<1x8x16x16xf32, #tpu.memory_space<vmem>>) attributes {dimension_semantics = [#tpu.dimension_semantics<parallel>, #tpu.dimension_semantics<parallel>], iteration_bounds = array<i64: 1, 2>, scalar_prefetch = 0 : i64, scratch_operands = 0 : i64, tpu.core_type = #tpu.core_type<tc>, window_params = [{transform_indices = @transform_0, window_bounds = array<i64: 8, 1, 4, 4>}, {pipeline_mode = #tpu.pipeline_mode<synchronous>, transform_indices = @transform_1, window_bounds = array<i64: 16, 4>}, {pipeline_mode = #tpu.pipeline_mode<synchronous>, transform_indices = @transform_2, window_bounds = array<i64: 4, 16>}, {transform_indices = @transform_3, window_bounds = array<i64: 1, 8, 16, 16>}]} {
    %c0 = arith.constant 0 : index
    %c0_0 = arith.constant 0 : index
    %0 = vector.load %arg3[%c0, %c0_0] : memref<16x4xf32, #tpu.memory_space<vmem>>, vector<16x4xf32>
    %c0_1 = arith.constant 0 : index
    %c0_2 = arith.constant 0 : index
    %1 = vector.load %arg4[%c0_1, %c0_2] : memref<4x16xf32, #tpu.memory_space<vmem>>, vector<4x16xf32>
    %c0_3 = arith.constant 0 : index
    %c0_4 = arith.constant 0 : index
    %c0_5 = arith.constant 0 : index
    %c0_6 = arith.constant 0 : index
    %2 = vector.load %arg2[%c0_3, %c0_4, %c0_5, %c0_6] : memref<8x1x4x4xf32, #tpu.memory_space<vmem>>, vector<1x1x4x4xf32>
    %3 = vector.shape_cast %2 : vector<1x1x4x4xf32> to vector<4x4xf32>
    %cst = arith.constant dense<0.000000e+00> : vector<16x4xf32>
    %4 = tpu.matmul %0, %3, %cst {dimension_numbers = #tpu.dot_dimension_numbers<[1], [0], [0], [1], [0, 0, 1, 1], [], []>} : vector<16x4xf32>, vector<4x4xf32>, vector<16x4xf32> -> vector<16x4xf32>
    %cst_7 = arith.constant dense<0.000000e+00> : vector<16x16xf32>
    %5 = tpu.matmul %4, %1, %cst_7 {dimension_numbers = #tpu.dot_dimension_numbers<[1], [0], [0], [1], [0, 0, 1, 1], [], []>} : vector<16x4xf32>, vector<4x16xf32>, vector<16x16xf32> -> vector<16x16xf32>
    %c0_8 = arith.constant 0 : index
    %c0_9 = arith.constant 0 : index
    %c0_10 = arith.constant 0 : index
    %c0_11 = arith.constant 0 : index
    %6 = vector.load %arg5[%c0_8, %c0_9, %c0_10, %c0_11] : memref<1x8x16x16xf32, #tpu.memory_space<vmem>>, vector<1x1x16x16xf32>
    %7 = vector.shape_cast %6 : vector<1x1x16x16xf32> to vector<16x16xf32>
    %8 = vector.shape_cast %5 : vector<16x16xf32> to vector<1x1x16x16xf32>
    tpu.vector_store %arg5[%c0_8, %c0_9, %c0_10, %c0_11], %8 {strides = array<i32>} : memref<1x8x16x16xf32, #tpu.memory_space<vmem>>, vector<1x1x16x16xf32>,
    %c1 = arith.constant 1 : index
    %c0_12 = arith.constant 0 : index
    %c0_13 = arith.constant 0 : index
    %c0_14 = arith.constant 0 : index
    %9 = vector.load %arg2[%c1, %c0_12, %c0_13, %c0_14] : memref<8x1x4x4xf32, #tpu.memory_space<vmem>>, vector<1x1x4x4xf32>
    %10 = vector.shape_cast %9 : vector<1x1x4x4xf32> to vector<4x4xf32>
    %cst_15 = arith.constant dense<0.000000e+00> : vector<16x4xf32>
    %11 = tpu.matmul %0, %10, %cst_15 {dimension_numbers = #tpu.dot_dimension_numbers<[1], [0], [0], [1], [0, 0, 1, 1], [], []>} : vector<16x4xf32>, vector<4x4xf32>, vector<16x4xf32> -> vector<16x4xf32>
    %cst_16 = arith.constant dense<0.000000e+00> : vector<16x16xf32>
    %12 = tpu.matmul %11, %1, %cst_16 {dimension_numbers = #tpu.dot_dimension_numbers<[1], [0], [0], [1], [0, 0, 1, 1], [], []>} : vector<16x4xf32>, vector<4x16xf32>, vector<16x16xf32> -> vector<16x16xf32>
    %c0_17 = arith.constant 0 : index
    %c1_18 = arith.constant 1 : index
    %c0_19 = arith.constant 0 : index
    %c0_20 = arith.constant 0 : index
    %13 = vector.load %arg5[%c0_17, %c1_18, %c0_19, %c0_20] : memref<1x8x16x16xf32, #tpu.memory_space<vmem>>, vector<1x1x16x16xf32>
    %14 = vector.shape_cast %13 : vector<1x1x16x16xf32> to vector<16x16xf32>
    %15 = vector.shape_cast %12 : vector<16x16xf32> to vector<1x1x16x16xf32>
    tpu.vector_store %arg5[%c0_17, %c1_18, %c0_19, %c0_20], %15 {strides = array<i32>} : memref<1x8x16x16xf32, #tpu.memory_space<vmem>>, vector<1x1x16x16xf32>,
    %c2 = arith.constant 2 : index
    %c0_21 = arith.constant 0 : index
    %c0_22 = arith.constant 0 : index
    %c0_23 = arith.constant 0 : index
    %16 = vector.load %arg2[%c2, %c0_21, %c0_22, %c0_23] : memref<8x1x4x4xf32, #tpu.memory_space<vmem>>, vector<1x1x4x4xf32>
    %17 = vector.shape_cast %16 : vector<1x1x4x4xf32> to vector<4x4xf32>
    %cst_24 = arith.constant dense<0.000000e+00> : vector<16x4xf32>
    %18 = tpu.matmul %0, %17, %cst_24 {dimension_numbers = #tpu.dot_dimension_numbers<[1], [0], [0], [1], [0, 0, 1, 1], [], []>} : vector<16x4xf32>, vector<4x4xf32>, vector<16x4xf32> -> vector<16x4xf32>
    %cst_25 = arith.constant dense<0.000000e+00> : vector<16x16xf32>
    %19 = tpu.matmul %18, %1, %cst_25 {dimension_numbers = #tpu.dot_dimension_numbers<[1], [0], [0], [1], [0, 0, 1, 1], [], []>} : vector<16x4xf32>, vector<4x16xf32>, vector<16x16xf32> -> vector<16x16xf32>
    %c0_26 = arith.constant 0 : index
    %c2_27 = arith.constant 2 : index
    %c0_28 = arith.constant 0 : index
    %c0_29 = arith.constant 0 : index
    %20 = vector.load %arg5[%c0_26, %c2_27, %c0_28, %c0_29] : memref<1x8x16x16xf32, #tpu.memory_space<vmem>>, vector<1x1x16x16xf32>
    %21 = vector.shape_cast %20 : vector<1x1x16x16xf32> to vector<16x16xf32>
    %22 = vector.shape_cast %19 : vector<16x16xf32> to vector<1x1x16x16xf32>
    tpu.vector_store %arg5[%c0_26, %c2_27, %c0_28, %c0_29], %22 {strides = array<i32>} : memref<1x8x16x16xf32, #tpu.memory_space<vmem>>, vector<1x1x16x16xf32>,
    %c3 = arith.constant 3 : index
    %c0_30 = arith.constant 0 : index
    %c0_31 = arith.constant 0 : index
    %c0_32 = arith.constant 0 : index
    %23 = vector.load %arg2[%c3, %c0_30, %c0_31, %c0_32] : memref<8x1x4x4xf32, #tpu.memory_space<vmem>>, vector<1x1x4x4xf32>
    %24 = vector.shape_cast %23 : vector<1x1x4x4xf32> to vector<4x4xf32>
    %cst_33 = arith.constant dense<0.000000e+00> : vector<16x4xf32>
    %25 = tpu.matmul %0, %24, %cst_33 {dimension_numbers = #tpu.dot_dimension_numbers<[1], [0], [0], [1], [0, 0, 1, 1], [], []>} : vector<16x4xf32>, vector<4x4xf32>, vector<16x4xf32> -> vector<16x4xf32>
    %cst_34 = arith.constant dense<0.000000e+00> : vector<16x16xf32>
    %26 = tpu.matmul %25, %1, %cst_34 {dimension_numbers = #tpu.dot_dimension_numbers<[1], [0], [0], [1], [0, 0, 1, 1], [], []>} : vector<16x4xf32>, vector<4x16xf32>, vector<16x16xf32> -> vector<16x16xf32>
    %c0_35 = arith.constant 0 : index
    %c3_36 = arith.constant 3 : index
    %c0_37 = arith.constant 0 : index
    %c0_38 = arith.constant 0 : index
    %27 = vector.load %arg5[%c0_35, %c3_36, %c0_37, %c0_38] : memref<1x8x16x16xf32, #tpu.memory_space<vmem>>, vector<1x1x16x16xf32>
    %28 = vector.shape_cast %27 : vector<1x1x16x16xf32> to vector<16x16xf32>
    %29 = vector.shape_cast %26 : vector<16x16xf32> to vector<1x1x16x16xf32>
    tpu.vector_store %arg5[%c0_35, %c3_36, %c0_37, %c0_38], %29 {strides = array<i32>} : memref<1x8x16x16xf32, #tpu.memory_space<vmem>>, vector<1x1x16x16xf32>,
    %c4 = arith.constant 4 : index
    %c0_39 = arith.constant 0 : index
    %c0_40 = arith.constant 0 : index
    %c0_41 = arith.constant 0 : index
    %30 = vector.load %arg2[%c4, %c0_39, %c0_40, %c0_41] : memref<8x1x4x4xf32, #tpu.memory_space<vmem>>, vector<1x1x4x4xf32>
    %31 = vector.shape_cast %30 : vector<1x1x4x4xf32> to vector<4x4xf32>
    %cst_42 = arith.constant dense<0.000000e+00> : vector<16x4xf32>
    %32 = tpu.matmul %0, %31, %cst_42 {dimension_numbers = #tpu.dot_dimension_numbers<[1], [0], [0], [1], [0, 0, 1, 1], [], []>} : vector<16x4xf32>, vector<4x4xf32>, vector<16x4xf32> -> vector<16x4xf32>
    %cst_43 = arith.constant dense<0.000000e+00> : vector<16x16xf32>
    %33 = tpu.matmul %32, %1, %cst_43 {dimension_numbers = #tpu.dot_dimension_numbers<[1], [0], [0], [1], [0, 0, 1, 1], [], []>} : vector<16x4xf32>, vector<4x16xf32>, vector<16x16xf32> -> vector<16x16xf32>
    %c0_44 = arith.constant 0 : index
    %c4_45 = arith.constant 4 : index
    %c0_46 = arith.constant 0 : index
    %c0_47 = arith.constant 0 : index
    %34 = vector.load %arg5[%c0_44, %c4_45, %c0_46, %c0_47] : memref<1x8x16x16xf32, #tpu.memory_space<vmem>>, vector<1x1x16x16xf32>
    %35 = vector.shape_cast %34 : vector<1x1x16x16xf32> to vector<16x16xf32>
    %36 = vector.shape_cast %33 : vector<16x16xf32> to vector<1x1x16x16xf32>
    tpu.vector_store %arg5[%c0_44, %c4_45, %c0_46, %c0_47], %36 {strides = array<i32>} : memref<1x8x16x16xf32, #tpu.memory_space<vmem>>, vector<1x1x16x16xf32>,
    %c5 = arith.constant 5 : index
    %c0_48 = arith.constant 0 : index
    %c0_49 = arith.constant 0 : index
    %c0_50 = arith.constant 0 : index
    %37 = vector.load %arg2[%c5, %c0_48, %c0_49, %c0_50] : memref<8x1x4x4xf32, #tpu.memory_space<vmem>>, vector<1x1x4x4xf32>
    %38 = vector.shape_cast %37 : vector<1x1x4x4xf32> to vector<4x4xf32>
    %cst_51 = arith.constant dense<0.000000e+00> : vector<16x4xf32>
    %39 = tpu.matmul %0, %38, %cst_51 {dimension_numbers = #tpu.dot_dimension_numbers<[1], [0], [0], [1], [0, 0, 1, 1], [], []>} : vector<16x4xf32>, vector<4x4xf32>, vector<16x4xf32> -> vector<16x4xf32>
    %cst_52 = arith.constant dense<0.000000e+00> : vector<16x16xf32>
    %40 = tpu.matmul %39, %1, %cst_52 {dimension_numbers = #tpu.dot_dimension_numbers<[1], [0], [0], [1], [0, 0, 1, 1], [], []>} : vector<16x4xf32>, vector<4x16xf32>, vector<16x16xf32> -> vector<16x16xf32>
    %c0_53 = arith.constant 0 : index
    %c5_54 = arith.constant 5 : index
    %c0_55 = arith.constant 0 : index
    %c0_56 = arith.constant 0 : index
    %41 = vector.load %arg5[%c0_53, %c5_54, %c0_55, %c0_56] : memref<1x8x16x16xf32, #tpu.memory_space<vmem>>, vector<1x1x16x16xf32>
    %42 = vector.shape_cast %41 : vector<1x1x16x16xf32> to vector<16x16xf32>
    %43 = vector.shape_cast %40 : vector<16x16xf32> to vector<1x1x16x16xf32>
    tpu.vector_store %arg5[%c0_53, %c5_54, %c0_55, %c0_56], %43 {strides = array<i32>} : memref<1x8x16x16xf32, #tpu.memory_space<vmem>>, vector<1x1x16x16xf32>,
    %c6 = arith.constant 6 : index
    %c0_57 = arith.constant 0 : index
    %c0_58 = arith.constant 0 : index
    %c0_59 = arith.constant 0 : index
    %44 = vector.load %arg2[%c6, %c0_57, %c0_58, %c0_59] : memref<8x1x4x4xf32, #tpu.memory_space<vmem>>, vector<1x1x4x4xf32>
    %45 = vector.shape_cast %44 : vector<1x1x4x4xf32> to vector<4x4xf32>
    %cst_60 = arith.constant dense<0.000000e+00> : vector<16x4xf32>
    %46 = tpu.matmul %0, %45, %cst_60 {dimension_numbers = #tpu.dot_dimension_numbers<[1], [0], [0], [1], [0, 0, 1, 1], [], []>} : vector<16x4xf32>, vector<4x4xf32>, vector<16x4xf32> -> vector<16x4xf32>
    %cst_61 = arith.constant dense<0.000000e+00> : vector<16x16xf32>
    %47 = tpu.matmul %46, %1, %cst_61 {dimension_numbers = #tpu.dot_dimension_numbers<[1], [0], [0], [1], [0, 0, 1, 1], [], []>} : vector<16x4xf32>, vector<4x16xf32>, vector<16x16xf32> -> vector<16x16xf32>
    %c0_62 = arith.constant 0 : index
    %c6_63 = arith.constant 6 : index
    %c0_64 = arith.constant 0 : index
    %c0_65 = arith.constant 0 : index
    %48 = vector.load %arg5[%c0_62, %c6_63, %c0_64, %c0_65] : memref<1x8x16x16xf32, #tpu.memory_space<vmem>>, vector<1x1x16x16xf32>
    %49 = vector.shape_cast %48 : vector<1x1x16x16xf32> to vector<16x16xf32>
    %50 = vector.shape_cast %47 : vector<16x16xf32> to vector<1x1x16x16xf32>
    tpu.vector_store %arg5[%c0_62, %c6_63, %c0_64, %c0_65], %50 {strides = array<i32>} : memref<1x8x16x16xf32, #tpu.memory_space<vmem>>, vector<1x1x16x16xf32>,
    %c7 = arith.constant 7 : index
    %c0_66 = arith.constant 0 : index
    %c0_67 = arith.constant 0 : index
    %c0_68 = arith.constant 0 : index
    %51 = vector.load %arg2[%c7, %c0_66, %c0_67, %c0_68] : memref<8x1x4x4xf32, #tpu.memory_space<vmem>>, vector<1x1x4x4xf32>
    %52 = vector.shape_cast %51 : vector<1x1x4x4xf32> to vector<4x4xf32>
    %cst_69 = arith.constant dense<0.000000e+00> : vector<16x4xf32>
    %53 = tpu.matmul %0, %52, %cst_69 {dimension_numbers = #tpu.dot_dimension_numbers<[1], [0], [0], [1], [0, 0, 1, 1], [], []>} : vector<16x4xf32>, vector<4x4xf32>, vector<16x4xf32> -> vector<16x4xf32>
    %cst_70 = arith.constant dense<0.000000e+00> : vector<16x16xf32>
    %54 = tpu.matmul %53, %1, %cst_70 {dimension_numbers = #tpu.dot_dimension_numbers<[1], [0], [0], [1], [0, 0, 1, 1], [], []>} : vector<16x4xf32>, vector<4x16xf32>, vector<16x16xf32> -> vector<16x16xf32>
    %c0_71 = arith.constant 0 : index
    %c7_72 = arith.constant 7 : index
    %c0_73 = arith.constant 0 : index
    %c0_74 = arith.constant 0 : index
    %55 = vector.load %arg5[%c0_71, %c7_72, %c0_73, %c0_74] : memref<1x8x16x16xf32, #tpu.memory_space<vmem>>, vector<1x1x16x16xf32>
    %56 = vector.shape_cast %55 : vector<1x1x16x16xf32> to vector<16x16xf32>
    %57 = vector.shape_cast %54 : vector<16x16xf32> to vector<1x1x16x16xf32>
    tpu.vector_store %arg5[%c0_71, %c7_72, %c0_73, %c0_74], %57 {strides = array<i32>} : memref<1x8x16x16xf32, #tpu.memory_space<vmem>>, vector<1x1x16x16xf32>,
    return
  }
  func.func @transform_0(%arg0: i32, %arg1: i32) -> (i32, i32, i32, i32) {
    %c0_i32 = arith.constant 0 : i32
    %c0_i32_0 = arith.constant 0 : i32
    %c0_i32_1 = arith.constant 0 : i32
    return %arg0, %arg1, %c0_i32, %c0_i32_0 : i32, i32, i32, i32
  }
  func.func @transform_1(%arg0: i32, %arg1: i32) -> (i32, i32) {
    %c0_i32 = arith.constant 0 : i32
    %c0_i32_0 = arith.constant 0 : i32
    %c0_i32_1 = arith.constant 0 : i32
    return %c0_i32, %c0_i32_0 : i32, i32
  }
  func.func @transform_2(%arg0: i32, %arg1: i32) -> (i32, i32) {
    %c0_i32 = arith.constant 0 : i32
    %c0_i32_0 = arith.constant 0 : i32
    %c0_i32_1 = arith.constant 0 : i32
    return %c0_i32, %c0_i32_0 : i32, i32
  }
  func.func @transform_3(%arg0: i32, %arg1: i32) -> (i32, i32, i32, i32) {
    %c0_i32 = arith.constant 0 : i32
    %c0_i32_0 = arith.constant 0 : i32
    %c0_i32_1 = arith.constant 0 : i32
    return %arg1, %arg0, %c0_i32, %c0_i32_0 : i32, i32, i32, i32
  }
}

</mosaic_0001>

<llo_original>
// kernel: segmentation_net_forward.3
$region0: #{segmentation_net_forward.3}
  #allocation0 [shape = 'u32[]', space=smem, size = 0x4, offset = 0x4, fixed_abs, tag = 'smem constant byte address 0x4 - core index']
  #allocation1 [shape = 'u32[144,128]{1,0:T(1,128)}', space=vmem, size = 0x12000, scoped, tag = 'internal scratch']
  %s0 = inlined_call_operand.vmem [shape: f32[8,27], index: 0, kind: input, shape index: {}]
  %s1 = inlined_call_operand.vmem [shape: f32[8,1], index: 1, kind: input, shape index: {}]
  %s2 = inlined_call_operand.vmem [shape: f32[27,128], index: 2, kind: input, shape index: {}]
  %s3 = inlined_call_operand.vmem [shape: f32[8,128], index: 3, kind: output, shape index: {}]
  %s4 = sld [smem:[#allocation0]]
  $region22: #{segmentation_net_forward.3} parent=0
    _
  %s6 = ssub.s32 1, %s4
  %s7 = scalar_select 0, %s6, %s4
  // Predicated region
  $region2: #{segmentation_net_forward.3} parent=0 // pred_check
    _
  $region3: #{segmentation_net_forward.3} parent=0 // pred_check_branch
    %9 = sbr.rel (0) target = $region5
  $region4: #{segmentation_net_forward.3} parent=0 // pred_region
    _
  $region5: #{segmentation_net_forward.3} parent=0 // pred_fallthru
    _
  // Predicated region
  $region6: #{segmentation_net_forward.3} parent=0 // pred_check
    _
  $region7: #{segmentation_net_forward.3} parent=0 // pred_check_branch
    %11 = sbr.rel (0) target = $region9
  $region8: #{segmentation_net_forward.3} parent=0 // pred_region
    _
  $region9: #{segmentation_net_forward.3} parent=0 // pred_fallthru
    _
  // Predicated region
  $region10: #{segmentation_net_forward.3} parent=0 // pred_check
    _
  $region11: #{segmentation_net_forward.3} parent=0 // pred_check_branch
    %13 = sbr.rel (0) target = $region13
  $region12: #{segmentation_net_forward.3} parent=0 // pred_region
    _
  $region13: #{segmentation_net_forward.3} parent=0 // pred_fallthru
    _
  %v14 = vld [vmem:[%s0] sm:$0xff]
  %v15 = vld [vmem:[%s2] sm:$0xff]
  %v16 = vld [vmem:[%s2 + $0x8] sm:$0xff]
  %v17 = vld [vmem:[%s2 + $0x10] sm:$0xff]
  %v18 = vld [vmem:[%s2 + $0x18] sm:$0x7]
  %v19 = vld [vmem:[%s1] sm:$0xff]
  %21 = vset.pattern.permute.xlu0 0
  %22 = vperm.xlu0 %21, %v19
  %v23 = vpop.permute.xlu0 %22
  %vm25 = vcmask 220160
  %v27 = vsel %vm25, %v14, 0
  %vm29 = vcmask 1042432
  %v31 = vsel %vm29, %v18, 0
  %33 = vmatprep.subr.mxu0 0.0
  %34 = vmatpush1.msra.mxu0 %v15
  %35 = vmatprep.subr.mxu0 0.0
  %36 = vmatpush1.msra.mxu0 %v16
  %37 = vmatprep.subr.mxu0 0.0
  %38 = vmatpush1.msra.mxu0 %v17
  %39 = vmatprep.subr.mxu0 0.0
  %40 = vmatpush1.msra.mxu0 %v31
  %41 = vmatprep.subr.mxu0 0.0
  %42 = vmatpush1.msra.mxu0 0.0
  %43 = vmatprep.subr.mxu0 0.0
  %44 = vmatpush1.msra.mxu0 0.0
  %45 = vmatprep.subr.mxu0 0.0
  %46 = vmatpush1.msra.mxu0 0.0
  %47 = vmatprep.subr.mxu0 0.0
  %48 = vmatpush1.msra.mxu0 0.0
  %49 = vmatprep.subr.mxu0 0.0
  %50 = vmatpush1.msra.mxu0 0.0
  %51 = vmatprep.subr.mxu0 0.0
  %52 = vmatpush1.msra.mxu0 0.0
  %53 = vmatprep.subr.mxu0 0.0
  %54 = vmatpush1.msra.mxu0 0.0
  %55 = vmatprep.subr.mxu0 0.0
  %56 = vmatpush1.msra.mxu0 0.0
  %57 = vmatprep.subr.mxu0 0.0
  %58 = vmatpush1.msra.mxu0 0.0
  %59 = vmatprep.subr.mxu0 0.0
  %60 = vmatpush1.msra.mxu0 0.0
  %61 = vmatprep.subr.mxu0 0.0
  %62 = vmatpush1.msra.mxu0 0.0
  %63 = vmatprep.subr.mxu0 0.0
  %64 = vmatpush1.msra.mxu0 0.0
  %65 = vmatprep.subr.mxu0 0.0
  %66 = vmatpush1.msra.mxu0 0.0
  %67 = vmatprep.subr.mxu0 0.0
  %68 = vmatpush1.msra.mxu0 0.0
  %69 = vmatprep.subr.mxu0 0.0
  %70 = vmatpush1.msra.mxu0 0.0
  %71 = vmatprep.subr.mxu0 0.0
  %72 = vmatpush1.msra.mxu0 0.0
  %73 = vmatprep.subr.mxu0 0.0
  %74 = vmatpush1.msra.mxu0 0.0
  %75 = vmatprep.subr.mxu0 0.0
  %76 = vmatpush1.msra.mxu0 0.0
  %77 = vmatprep.subr.mxu0 0.0
  %78 = vmatpush1.msra.mxu0 0.0
  %79 = vmatprep.subr.mxu0 0.0
  %80 = vmatpush1.msra.mxu0 0.0
  %81 = vmatprep.subr.mxu0 0.0
  %82 = vmatpush1.msra.mxu0 0.0
  %83 = vmatprep.subr.mxu0 0.0
  %84 = vmatpush1.msra.mxu0 0.0
  %85 = vmatprep.subr.mxu0 0.0
  %86 = vmatpush1.msra.mxu0 0.0
  %87 = vmatprep.subr.mxu0 0.0
  %88 = vmatpush1.msra.mxu0 0.0
  %89 = vmatprep.subr.mxu0 0.0
  %90 = vmatpush1.msra.mxu0 0.0
  %91 = vmatprep.subr.mxu0 0.0
  %92 = vmatpush1.msra.mxu0 0.0
  %93 = vmatprep.subr.mxu0 0.0
  %94 = vmatpush1.msra.mxu0 0.0
  %95 = vmatprep.subr.mxu0 0.0
  %96 = vmatpush1.msra.mxu0 0.0
  %97 = vmatprep.mubr.f32.mxu0 0.0
  %98 = vmatmul.mubr.f32.gmra.mrb[0].mxu0 %v27
  %v99 = vpop.f32.mrb[0].mxu0
  %v100 = vadd.f32 %v23, %v99
  %v101 = vpop.f32.mrb[0].mxu0
  %102 = vdwg.mxu0
  %v103 = vmax.f32 %v100, 0.0
  %104 = vst [vmem:[%s3] sm:$0xff] %v103
  // Predicated region
  $region14: #{segmentation_net_forward.3} parent=0 // pred_check
    _
  $region15: #{segmentation_net_forward.3} parent=0 // pred_check_branch
    %106 = sbr.rel (0) target = $region17
  $region16: #{segmentation_net_forward.3} parent=0 // pred_region
    _
  $region17: #{segmentation_net_forward.3} parent=0 // pred_fallthru
    _
  // Predicated region
  $region18: #{segmentation_net_forward.3} parent=0 // pred_check
    _
  $region19: #{segmentation_net_forward.3} parent=0 // pred_check_branch
    %108 = sbr.rel (0) target = $region21
  $region20: #{segmentation_net_forward.3} parent=0 // pred_region
    _
  $region21: #{segmentation_net_forward.3} parent=0 // pred_fallthru
    _

// kernel: segmentation_net_forward.4
$region0: #{segmentation_net_forward.4}
  #allocation0 [shape = 'u32[]', space=smem, size = 0x4, offset = 0x4, fixed_abs, tag = 'smem constant byte address 0x4 - core index']
  #allocation1 [shape = 'u32[144,128]{1,0:T(1,128)}', space=vmem, size = 0x12000, scoped, tag = 'internal scratch']
  %s0 = inlined_call_operand.vmem [shape: f32[8,72], index: 0, kind: input, shape index: {}]
  %s1 = inlined_call_operand.vmem [shape: f32[8,1], index: 1, kind: input, shape index: {}]
  %s2 = inlined_call_operand.vmem [shape: f32[72,128], index: 2, kind: input, shape index: {}]
  %s3 = inlined_call_operand.vmem [shape: f32[8,128], index: 3, kind: output, shape index: {}]
  %s4 = sld [smem:[#allocation0]]
  $region22: #{segmentation_net_forward.4} parent=0
    _
  %s6 = ssub.s32 1, %s4
  %s7 = scalar_select 0, %s6, %s4
  // Predicated region
  $region2: #{segmentation_net_forward.4} parent=0 // pred_check
    _
  $region3: #{segmentation_net_forward.4} parent=0 // pred_check_branch
    %9 = sbr.rel (0) target = $region5
  $region4: #{segmentation_net_forward.4} parent=0 // pred_region
    _
  $region5: #{segmentation_net_forward.4} parent=0 // pred_fallthru
    _
  // Predicated region
  $region6: #{segmentation_net_forward.4} parent=0 // pred_check
    _
  $region7: #{segmentation_net_forward.4} parent=0 // pred_check_branch
    %11 = sbr.rel (0) target = $region9
  $region8: #{segmentation_net_forward.4} parent=0 // pred_region
    _
  $region9: #{segmentation_net_forward.4} parent=0 // pred_fallthru
    _
  // Predicated region
  $region10: #{segmentation_net_forward.4} parent=0 // pred_check
    _
  $region11: #{segmentation_net_forward.4} parent=0 // pred_check_branch
    %13 = sbr.rel (0) target = $region13
  $region12: #{segmentation_net_forward.4} parent=0 // pred_region
    _
  $region13: #{segmentation_net_forward.4} parent=0 // pred_fallthru
    _
  %v14 = vld [vmem:[%s0] sm:$0xff]
  %v15 = vld [vmem:[%s2] sm:$0xff]
  %v16 = vld [vmem:[%s2 + $0x8] sm:$0xff]
  %v17 = vld [vmem:[%s2 + $0x10] sm:$0xff]
  %v18 = vld [vmem:[%s2 + $0x18] sm:$0xff]
  %v19 = vld [vmem:[%s2 + $0x20] sm:$0xff]
  %v20 = vld [vmem:[%s2 + $0x28] sm:$0xff]
  %v21 = vld [vmem:[%s2 + $0x30] sm:$0xff]
  %v22 = vld [vmem:[%s2 + $0x38] sm:$0xff]
  %v23 = vld [vmem:[%s2 + $0x40] sm:$0xff]
  %v24 = vld [vmem:[%s1] sm:$0xff]
  %26 = vset.pattern.permute.xlu0 0
  %27 = vperm.xlu0 %26, %v24
  %v28 = vpop.permute.xlu0 %27
  %vm30 = vcmask 588800
  %v32 = vsel %vm30, %v14, 0
  %34 = vmatprep.subr.mxu0 0.0
  %35 = vmatpush1.msra.mxu0 %v15
  %36 = vmatprep.subr.mxu0 0.0
  %37 = vmatpush1.msra.mxu0 %v16
  %38 = vmatprep.subr.mxu0 0.0
  %39 = vmatpush1.msra.mxu0 %v17
  %40 = vmatprep.subr.mxu0 0.0
  %41 = vmatpush1.msra.mxu0 %v18
  %42 = vmatprep.subr.mxu0 0.0
  %43 = vmatpush1.msra.mxu0 %v19
  %44 = vmatprep.subr.mxu0 0.0
  %45 = vmatpush1.msra.mxu0 %v20
  %46 = vmatprep.subr.mxu0 0.0
  %47 = vmatpush1.msra.mxu0 %v21
  %48 = vmatprep.subr.mxu0 0.0
  %49 = vmatpush1.msra.mxu0 %v22
  %50 = vmatprep.subr.mxu0 0.0
  %51 = vmatpush1.msra.mxu0 %v23
  %52 = vmatprep.subr.mxu0 0.0
  %53 = vmatpush1.msra.mxu0 0.0
  %54 = vmatprep.subr.mxu0 0.0
  %55 = vmatpush1.msra.mxu0 0.0
  %56 = vmatprep.subr.mxu0 0.0
  %57 = vmatpush1.msra.mxu0 0.0
  %58 = vmatprep.subr.mxu0 0.0
  %59 = vmatpush1.msra.mxu0 0.0
  %60 = vmatprep.subr.mxu0 0.0
  %61 = vmatpush1.msra.mxu0 0.0
  %62 = vmatprep.subr.mxu0 0.0
  %63 = vmatpush1.msra.mxu0 0.0
  %64 = vmatprep.subr.mxu0 0.0
  %65 = vmatpush1.msra.mxu0 0.0
  %66 = vmatprep.subr.mxu0 0.0
  %67 = vmatpush1.msra.mxu0 0.0
  %68 = vmatprep.subr.mxu0 0.0
  %69 = vmatpush1.msra.mxu0 0.0
  %70 = vmatprep.subr.mxu0 0.0
  %71 = vmatpush1.msra.mxu0 0.0
  %72 = vmatprep.subr.mxu0 0.0
  %73 = vmatpush1.msra.mxu0 0.0
  %74 = vmatprep.subr.mxu0 0.0
  %75 = vmatpush1.msra.mxu0 0.0
  %76 = vmatprep.subr.mxu0 0.0
  %77 = vmatpush1.msra.mxu0 0.0
  %78 = vmatprep.subr.mxu0 0.0
  %79 = vmatpush1.msra.mxu0 0.0
  %80 = vmatprep.subr.mxu0 0.0
  %81 = vmatpush1.msra.mxu0 0.0
  %82 = vmatprep.subr.mxu0 0.0
  %83 = vmatpush1.msra.mxu0 0.0
  %84 = vmatprep.subr.mxu0 0.0
  %85 = vmatpush1.msra.mxu0 0.0
  %86 = vmatprep.subr.mxu0 0.0
  %87 = vmatpush1.msra.mxu0 0.0
  %88 = vmatprep.subr.mxu0 0.0
  %89 = vmatpush1.msra.mxu0 0.0
  %90 = vmatprep.subr.mxu0 0.0
  %91 = vmatpush1.msra.mxu0 0.0
  %92 = vmatprep.subr.mxu0 0.0
  %93 = vmatpush1.msra.mxu0 0.0
  %94 = vmatprep.subr.mxu0 0.0
  %95 = vmatpush1.msra.mxu0 0.0
  %96 = vmatprep.subr.mxu0 0.0
  %97 = vmatpush1.msra.mxu0 0.0
  %98 = vmatprep.mubr.f32.mxu0 0.0
  %99 = vmatmul.mubr.f32.gmra.mrb[0].mxu0 %v32
  %v100 = vpop.f32.mrb[0].mxu0
  %v101 = vadd.f32 %v28, %v100
  %v102 = vpop.f32.mrb[0].mxu0
  %103 = vdwg.mxu0
  %v104 = vmax.f32 %v101, 0.0
  %105 = vst [vmem:[%s3] sm:$0xff] %v104
  // Predicated region
  $region14: #{segmentation_net_forward.4} parent=0 // pred_check
    _
  $region15: #{segmentation_net_forward.4} parent=0 // pred_check_branch
    %107 = sbr.rel (0) target = $region17
  $region16: #{segmentation_net_forward.4} parent=0 // pred_region
    _
  $region17: #{segmentation_net_forward.4} parent=0 // pred_fallthru
    _
  // Predicated region
  $region18: #{segmentation_net_forward.4} parent=0 // pred_check
    _
  $region19: #{segmentation_net_forward.4} parent=0 // pred_check_branch
    %109 = sbr.rel (0) target = $region21
  $region20: #{segmentation_net_forward.4} parent=0 // pred_region
    _
  $region21: #{segmentation_net_forward.4} parent=0 // pred_fallthru
    _

// kernel: segmentation_net_forward.5
$region0: #{segmentation_net_forward.5}
  #allocation0 [shape = 'u32[]', space=smem, size = 0x4, offset = 0x4, fixed_abs, tag = 'smem constant byte address 0x4 - core index']
  #allocation1 [shape = 'u32[144,128]{1,0:T(1,128)}', space=vmem, size = 0x12000, scoped, tag = 'internal scratch']
  %s0 = inlined_call_operand.vmem [shape: f32[8,2,4,4], index: 0, kind: input, shape index: {}]
  %s1 = inlined_call_operand.vmem [shape: f32[16,4], index: 1, kind: input, shape index: {}]
  %s2 = inlined_call_operand.vmem [shape: f32[4,16], index: 2, kind: input, shape index: {}]
  %s3 = inlined_call_operand.hbm [shape: f32[2,8,16,16], index: 3, kind: output, shape index: {}]
  %s4 = sld [smem:[#allocation0]]
  $region86: #{segmentation_net_forward.5} parent=0
    _
  %s6 = ssub.s32 1, %s4
  %s7 = scalar_select 0, %s6, %s4
  $region1: #{segmentation_net_forward.5} parent=0
    #allocation2 [shape = 'u8[32768]{0}', space=vmem, size = 0x8000, scoped, tag = 'input window, operand 0']
    #allocation3 [shape = 'u8[131072]{0}', space=vmem, size = 0x20000, scoped, tag = 'output window, operand 0']
    #allocation4 [shape = 's32[2]{0}', space=sflag, size = 0x8, scoped, tag = 'scoped memory for segmentation_net_forward.5']
    %8 = vsyncpa [#allocation4], 0
    %s9 = scalar_lea.sflag [#allocation4], 1
    %10 = vsyncpa %s9, 0
    loop: start=0, step=1, limit=4
    $region2: #{segmentation_net_forward.5} parent=1 // loop_pre_header
      _
    $region3: #{segmentation_net_forward.5} parent=1 // loop_header
      %s12 = sphi 0, %s16
      %p13 = scmp.ge.s32.totalorder %s12, 4
      %s19 = sphi 0, %s31
      %s20 = sphi 0, %s27
      %s21 = sphi 0, %s19
      %s22 = sphi 0, %s20
      %s23 = sphi 0, %s21
      %s24 = sphi 0, %s22
      %s36 = sphi 0, %s38
      %s39 = sphi 0, %s36
      %s40 = sphi 0, %s39
      %s56 = sphi 0, %s40
      %s60 = sphi 0, %s60
      %s62 = sphi 0, %s60
      %s63 = sphi 0, %s62
      %s77 = sphi 0, %s63
      %s81 = sphi 0, %s81
      %s83 = sphi 0, %s81
      %s84 = sphi 0, %s83
      %s98 = sphi 0, %s84
      %s106 = sphi 0, %s108
      %s109 = sphi 0, %s106
      %s110 = sphi 0, %s109
      %s126 = sphi 0, %s110
    $region4: #{segmentation_net_forward.5} parent=1 // loop_header_branch
      %15 = sbr.rel (%p13) target = $region8
    $region5: #{segmentation_net_forward.5} parent=1 // loop_body
      %s17 = ssub.s32 %s12, 1
      %s18 = ssub.s32 %s12, 2
      %s25 = sadd.s32 1, %s20
      %p26 = scmp.ge.s32.totalorder %s25, 2
      %s27 = scalar_select %p26, 0, %s25
      %s28 = sadd.s32 1, %s19
      %s29 = scalar_select %p26, %s28, %s19
      %p30 = scmp.ge.s32.totalorder %s29, 1
      %s31 = scalar_select %p30, 0, %s29
      %s32 = ssub.s32 %s19, %s31
      %s33 = ssub.s32 %s20, %s27
      %s34 = sor.u32 %s32, %s33
      %p35 = scmp.eq.s32.totalorder %s34, 0
      %s37 = sadd.s32 %s36, 1
      %s38 = scalar_select %p35, %s36, %s37
      %p41 = pneg %p35
      %p42 = scmp.eq.s32.totalorder %s12, 1
      %p43 = por %p41, %p42
      %p44 = scmp.ne.s32.totalorder %s36, %s39
      %p45 = scmp.eq.s32.totalorder %s12, 0
      %p46 = por %p44, %p45
      %p47 = scmp.ne.s32.totalorder %s36, %s39
      %p48 = scmp.eq.s32.totalorder %s17, 1
      %p49 = por %p47, %p48
      %p50 = scmp.ne.s32.totalorder %s39, %s40
      %p51 = scmp.eq.s32.totalorder %s17, 0
      %p52 = por %p50, %p51
      %p53 = scmp.ne.s32.totalorder %s39, %s40
      %p54 = scmp.eq.s32.totalorder %s18, 1
      %p55 = por %p53, %p54
      %p57 = scmp.ne.s32.totalorder %s40, %s56
      %p58 = scmp.eq.s32.totalorder %s18, 0
      %p59 = por %p57, %p58
      %s61 = sadd.s32 %s60, 1
      %p64 = scmp.eq.s32.totalorder %s12, 1
      %p65 = scmp.ne.s32.totalorder %s60, %s62
      %p66 = scmp.eq.s32.totalorder %s12, 0
      %p67 = por %p65, %p66
      %p68 = scmp.ne.s32.totalorder %s60, %s62
      %p69 = scmp.eq.s32.totalorder %s17, 1
      %p70 = por %p68, %p69
      %p71 = scmp.ne.s32.totalorder %s62, %s63
      %p72 = scmp.eq.s32.totalorder %s17, 0
      %p73 = por %p71, %p72
      %p74 = scmp.ne.s32.totalorder %s62, %s63
      %p75 = scmp.eq.s32.totalorder %s18, 1
      %p76 = por %p74, %p75
      %p78 = scmp.ne.s32.totalorder %s63, %s77
      %p79 = scmp.eq.s32.totalorder %s18, 0
      %p80 = por %p78, %p79
      %s82 = sadd.s32 %s81, 1
      %p85 = scmp.eq.s32.totalorder %s12, 1
      %p86 = scmp.ne.s32.totalorder %s81, %s83
      %p87 = scmp.eq.s32.totalorder %s12, 0
      %p88 = por %p86, %p87
      %p89 = scmp.ne.s32.totalorder %s81, %s83
      %p90 = scmp.eq.s32.totalorder %s17, 1
      %p91 = por %p89, %p90
      %p92 = scmp.ne.s32.totalorder %s83, %s84
      %p93 = scmp.eq.s32.totalorder %s17, 0
      %p94 = por %p92, %p93
      %p95 = scmp.ne.s32.totalorder %s83, %s84
      %p96 = scmp.eq.s32.totalorder %s18, 1
      %p97 = por %p95, %p96
      %p99 = scmp.ne.s32.totalorder %s84, %s98
      %p100 = scmp.eq.s32.totalorder %s18, 0
      %p101 = por %p99, %p100
      %s102 = ssub.s32 %s20, %s27
      %s103 = ssub.s32 %s19, %s31
      %s104 = sor.u32 %s102, %s103
      %p105 = scmp.eq.s32.totalorder %s104, 0
      %s107 = sadd.s32 %s106, 1
      %s108 = scalar_select %p105, %s106, %s107
      %p111 = pneg %p105
      %p112 = scmp.eq.s32.totalorder %s12, 1
      %p113 = por %p111, %p112
      %p114 = scmp.ne.s32.totalorder %s106, %s109
      %p115 = scmp.eq.s32.totalorder %s12, 0
      %p116 = por %p114, %p115
      %p117 = scmp.ne.s32.totalorder %s106, %s109
      %p118 = scmp.eq.s32.totalorder %s17, 1
      %p119 = por %p117, %p118
      %p120 = scmp.ne.s32.totalorder %s109, %s110
      %p121 = scmp.eq.s32.totalorder %s17, 0
      %p122 = por %p120, %p121
      %p123 = scmp.ne.s32.totalorder %s109, %s110
      %p124 = scmp.eq.s32.totalorder %s18, 1
      %p125 = por %p123, %p124
      %p127 = scmp.ne.s32.totalorder %s110, %s126
      %p128 = scmp.eq.s32.totalorder %s18, 0
      %p129 = por %p127, %p128
      %p130 = scmp.le.s32.totalorder 1, %s12
      %p131 = scmp.lt.s32.totalorder %s12, 3
      %p132 = pnand %p130, %p131
      %p133 = pneg %p132
      // Predicated region
      $region9: #{segmentation_net_forward.5} parent=5 // pred_check
        _
      $region10: #{segmentation_net_forward.5} parent=5 // pred_check_branch
        %135 = sbr.rel (%p132) target = $region12
      $region11: #{segmentation_net_forward.5} parent=5 // pred_region
        %s136 = ssub.s32 %s12, 1
        // Predicated region
        $region13: #{segmentation_net_forward.5} parent=11 // pred_check
          %p137 = pneg %p73
        $region14: #{segmentation_net_forward.5} parent=11 // pred_check_branch
          %139 = sbr.rel (%p137) target = $region16
        $region15: #{segmentation_net_forward.5} parent=11 // pred_region
          _
        $region16: #{segmentation_net_forward.5} parent=11 // pred_fallthru
          _
        // Predicated region
        $region17: #{segmentation_net_forward.5} parent=11 // pred_check
          %p140 = pneg %p94
        $region18: #{segmentation_net_forward.5} parent=11 // pred_check_branch
          %142 = sbr.rel (%p140) target = $region20
        $region19: #{segmentation_net_forward.5} parent=11 // pred_region
          _
        $region20: #{segmentation_net_forward.5} parent=11 // pred_fallthru
          _
      $region12: #{segmentation_net_forward.5} parent=5 // pred_fallthru
        _
      %p143 = scmp.lt.s32.totalorder %s12, 2
      // Predicated region
      $region21: #{segmentation_net_forward.5} parent=5 // pred_check
        %p144 = pneg %p143
      $region22: #{segmentation_net_forward.5} parent=5 // pred_check_branch
        %146 = sbr.rel (%p144) target = $region24
      $region23: #{segmentation_net_forward.5} parent=5 // pred_region
        // Predicated region
        $region25: #{segmentation_net_forward.5} parent=23 // pred_check
          %p147 = pneg %p46
        $region26: #{segmentation_net_forward.5} parent=23 // pred_check_branch
          %149 = sbr.rel (%p147) target = $region28
        $region27: #{segmentation_net_forward.5} parent=23 // pred_region
          %s150 = sand.u32 %s36, 1
          %s151 = sand.u32 %s36, 1
          %s152 = smul.addr %s151, 32
          %s153 = scalar_lea.vmem [#allocation2], %s152
          %s154 = smul.u32 8, %s19
          %s155 = smul.addr %s154, 2
          %s156 = sadd.s32 %s20, %s155
          %s157 = smul.addr %s156, 4
          %s158 = scalar_lea.vmem %s0, %s157
          // Predicated region
          $region29: #{segmentation_net_forward.5} parent=27 // pred_check
            _
          $region30: #{segmentation_net_forward.5} parent=27 // pred_check_branch
            %160 = sbr.rel (0) target = $region32
          $region31: #{segmentation_net_forward.5} parent=27 // pred_region
            // Predicated region
            $region33: #{segmentation_net_forward.5} parent=31 // pred_check
              _
            $region34: #{segmentation_net_forward.5} parent=31 // pred_check_branch
              %162 = sbr.rel target = $region36
            $region35: #{segmentation_net_forward.5} parent=31 // pred_region
              // Predicated region
              $region48: #{segmentation_net_forward.5} parent=35 // pred_check
                _
              $region49: #{segmentation_net_forward.5} parent=35 // pred_check_branch
                %191 = sbr.rel (0) target = $region51
              $region50: #{segmentation_net_forward.5} parent=35 // pred_region
                loop: start=0, step=1, limit=1
                $region52: #{segmentation_net_forward.5} parent=50 // loop_pre_header
                  _
                $region53: #{segmentation_net_forward.5} parent=50 // loop_header
                  %s193 = sphi 0, %s197
                  %p194 = scmp.ge.s32.totalorder %s193, 1
                  %s198 = sphi %s158, %s158
                  %s199 = sphi %s153, %s153
                $region54: #{segmentation_net_forward.5} parent=50 // loop_header_branch
                  %196 = sbr.rel (%p194) target = $region58
                $region55: #{segmentation_net_forward.5} parent=50 // loop_body
                  _
                $region56: #{segmentation_net_forward.5} parent=50 // loop_footer
                  %s197 = sadd.s32 1, %s193
                $region57: #{segmentation_net_forward.5} parent=50 // loop_footer_branch
                  %192 = sbr.rel target = $region53
                $region58: #{segmentation_net_forward.5} parent=50 // loop_exit
                  _
                loop: start=0, step=1, limit=1
                $region59: #{segmentation_net_forward.5} parent=50 // loop_pre_header
                  _
                $region60: #{segmentation_net_forward.5} parent=50 // loop_header
                  %s202 = sphi 0, %s206
                  %p203 = scmp.ge.s32.totalorder %s202, 1
                  %s207 = sphi %s158, %s158
                  %s208 = sphi %s153, %s153
                $region61: #{segmentation_net_forward.5} parent=50 // loop_header_branch
                  %205 = sbr.rel (%p203) target = $region65
                $region62: #{segmentation_net_forward.5} parent=50 // loop_body
                  %v209 = vld [vmem:[%s207] sm:$0xf]
                  %210 = vst [vmem:[%s208] sm:$0xf] %v209
                  %v211 = vld [vmem:[%s207 + $0x8] sm:$0xf]
                  %212 = vst [vmem:[%s208 + $0x4] sm:$0xf] %v211
                  %v213 = vld [vmem:[%s207 + $0x10] sm:$0xf]
                  %214 = vst [vmem:[%s208 + $0x8] sm:$0xf] %v213
                  %v215 = vld [vmem:[%s207 + $0x18] sm:$0xf]
                  %216 = vst [vmem:[%s208 + $0xc] sm:$0xf] %v215
                  %v217 = vld [vmem:[%s207 + $0x20] sm:$0xf]
                  %218 = vst [vmem:[%s208 + $0x10] sm:$0xf] %v217
                  %v219 = vld [vmem:[%s207 + $0x28] sm:$0xf]
                  %220 = vst [vmem:[%s208 + $0x14] sm:$0xf] %v219
                  %v221 = vld [vmem:[%s207 + $0x30] sm:$0xf]
                  %222 = vst [vmem:[%s208 + $0x18] sm:$0xf] %v221
                  %v223 = vld [vmem:[%s207 + $0x38] sm:$0xf]
                  %224 = vst [vmem:[%s208 + $0x1c] sm:$0xf] %v223
                $region63: #{segmentation_net_forward.5} parent=50 // loop_footer
                  %s206 = sadd.s32 1, %s202
                $region64: #{segmentation_net_forward.5} parent=50 // loop_footer_branch
                  %201 = sbr.rel target = $region60
                $region65: #{segmentation_net_forward.5} parent=50 // loop_exit
                  _
              $region51: #{segmentation_net_forward.5} parent=35 // pred_fallthru
                _
            $region36: #{segmentation_net_forward.5} parent=31 // pred_fallthru
              _
            // Predicated region
            $region37: #{segmentation_net_forward.5} parent=31 // pred_check
              _
            $region38: #{segmentation_net_forward.5} parent=31 // pred_check_branch
              %164 = sbr.rel (0) target = $region40
            $region39: #{segmentation_net_forward.5} parent=31 // pred_region
              loop: start=0, step=1, limit=1
              $region41: #{segmentation_net_forward.5} parent=39 // loop_pre_header
                _
              $region42: #{segmentation_net_forward.5} parent=39 // loop_header
                %s167 = sphi 0, %s171
                %p168 = scmp.ge.s32.totalorder %s167, 1
                %s172 = sphi %s158, %s158
                %s173 = sphi %s153, %s153
              $region43: #{segmentation_net_forward.5} parent=39 // loop_header_branch
                %170 = sbr.rel (%p168) target = $region47
              $region44: #{segmentation_net_forward.5} parent=39 // loop_body
                %v174 = vld [vmem:[%s172] sm:$0xf]
                %175 = vst [vmem:[%s173] sm:$0xf] %v174
                %v176 = vld [vmem:[%s172 + $0x8] sm:$0xf]
                %177 = vst [vmem:[%s173 + $0x4] sm:$0xf] %v176
                %v178 = vld [vmem:[%s172 + $0x10] sm:$0xf]
                %179 = vst [vmem:[%s173 + $0x8] sm:$0xf] %v178
                %v180 = vld [vmem:[%s172 + $0x18] sm:$0xf]
                %181 = vst [vmem:[%s173 + $0xc] sm:$0xf] %v180
                %v182 = vld [vmem:[%s172 + $0x20] sm:$0xf]
                %183 = vst [vmem:[%s173 + $0x10] sm:$0xf] %v182
                %v184 = vld [vmem:[%s172 + $0x28] sm:$0xf]
                %185 = vst [vmem:[%s173 + $0x14] sm:$0xf] %v184
                %v186 = vld [vmem:[%s172 + $0x30] sm:$0xf]
                %187 = vst [vmem:[%s173 + $0x18] sm:$0xf] %v186
                %v188 = vld [vmem:[%s172 + $0x38] sm:$0xf]
                %189 = vst [vmem:[%s173 + $0x1c] sm:$0xf] %v188
              $region45: #{segmentation_net_forward.5} parent=39 // loop_footer
                %s171 = sadd.s32 1, %s167
              $region46: #{segmentation_net_forward.5} parent=39 // loop_footer_branch
                %166 = sbr.rel target = $region42
              $region47: #{segmentation_net_forward.5} parent=39 // loop_exit
                _
            $region40: #{segmentation_net_forward.5} parent=31 // pred_fallthru
              _
          $region32: #{segmentation_net_forward.5} parent=27 // pred_fallthru
            _
          %225 = vnop
        $region28: #{segmentation_net_forward.5} parent=23 // pred_fallthru
          _
      $region24: #{segmentation_net_forward.5} parent=5 // pred_fallthru
        _
      %p226 = scmp.le.s32.totalorder 1, %s12
      %p227 = scmp.lt.s32.totalorder %s12, 3
      %p228 = pnand %p226, %p227
      %p229 = pneg %p228
      // Predicated region
      $region66: #{segmentation_net_forward.5} parent=5 // pred_check
        _
      $region67: #{segmentation_net_forward.5} parent=5 // pred_check_branch
        %231 = sbr.rel (%p228) target = $region69
      $region68: #{segmentation_net_forward.5} parent=5 // pred_region
        %s232 = ssub.s32 %s12, 1
        %s233 = sand.u32 %s39, 1
        %s234 = sand.u32 %s39, 1
        %s235 = smul.addr %s234, 32
        %s236 = scalar_lea.vmem [#allocation2], %s235
        // Predicated region
        $region70: #{segmentation_net_forward.5} parent=68 // pred_check
          %p237 = pneg %p52
        $region71: #{segmentation_net_forward.5} parent=68 // pred_check_branch
          %239 = sbr.rel (%p237) target = $region73
        $region72: #{segmentation_net_forward.5} parent=68 // pred_region
          _
        $region73: #{segmentation_net_forward.5} parent=68 // pred_fallthru
          _
        %s240 = sand.u32 %s39, 1
        %s241 = sand.u32 %s39, 1
        %s242 = smul.addr %s241, 32
        %s243 = scalar_lea.vmem [#allocation2], %s242
        %p244 = pneg %p52
        %p245 = pneg %p49
        %p246 = pneg %p73
        %p247 = pneg %p70
        %p248 = pneg %p94
        %p249 = pneg %p91
        %p250 = pneg %p122
        %p251 = pneg %p119
        %s252 = sand.u32 %s109, 1
        %s253 = scalar_lea.sflag [#allocation4], %s252
        %s254 = sand.u32 %s109, 1
        %s255 = smul.addr %s254, 128
        %s256 = scalar_lea.vmem [#allocation3], %s255
        %s257 = smul.u32 8, %s21
        %s258 = smul.u32 8, %s21
        %v259 = vld [vmem:[%s1] sm:$0xff]
        %v260 = vld [vmem:[%s1 + $0x8] sm:$0xff]
        %v261 = vld [vmem:[%s2] sm:$0xf]
        %v262 = vld [vmem:[%s236] sm:$0xf]
        %vm263 = vcmask 31744
        %v265 = vsel %vm263, %v259, 0
        %v268 = vsel %vm263, %v260, 0
        %vm270 = vcmask 1043456
        %v272 = vsel %vm270, %v262, 0
        %274 = vmatprep.subr.mxu0 0.0
        %275 = vmatpush1.msra.mxu0 %v272
        %276 = vmatprep.subr.mxu0 0.0
        %277 = vmatpush1.msra.mxu0 0.0
        %278 = vmatprep.subr.mxu0 0.0
        %279 = vmatpush1.msra.mxu0 0.0
        %280 = vmatprep.subr.mxu0 0.0
        %281 = vmatpush1.msra.mxu0 0.0
        %282 = vmatprep.subr.mxu0 0.0
        %283 = vmatpush1.msra.mxu0 0.0
        %284 = vmatprep.subr.mxu0 0.0
        %285 = vmatpush1.msra.mxu0 0.0
        %286 = vmatprep.subr.mxu0 0.0
        %287 = vmatpush1.msra.mxu0 0.0
        %288 = vmatprep.subr.mxu0 0.0
        %289 = vmatpush1.msra.mxu0 0.0
        %290 = vmatprep.subr.mxu0 0.0
        %291 = vmatpush1.msra.mxu0 0.0
        %292 = vmatprep.subr.mxu0 0.0
        %293 = vmatpush1.msra.mxu0 0.0
        %294 = vmatprep.subr.mxu0 0.0
        %295 = vmatpush1.msra.mxu0 0.0
        %296 = vmatprep.subr.mxu0 0.0
        %297 = vmatpush1.msra.mxu0 0.0
        %298 = vmatprep.subr.mxu0 0.0
        %299 = vmatpush1.msra.mxu0 0.0
        %300 = vmatprep.subr.mxu0 0.0
        %301 = vmatpush1.msra.mxu0 0.0
        %302 = vmatprep.subr.mxu0 0.0
        %303 = vmatpush1.msra.mxu0 0.0
        %304 = vmatprep.subr.mxu0 0.0
        %305 = vmatpush1.msra.mxu0 0.0
        %306 = vmatprep.subr.mxu0 0.0
        %307 = vmatpush1.msra.mxu0 0.0
        %308 = vmatprep.subr.mxu0 0.0
        %309 = vmatpush1.msra.mxu0 0.0
        %310 = vmatprep.subr.mxu0 0.0
        %311 = vmatpush1.msra.mxu0 0.0
        %312 = vmatprep.subr.mxu0 0.0
        %313 = vmatpush1.msra.mxu0 0.0
        %314 = vmatprep.subr.mxu0 0.0
        %315 = vmatpush1.msra.mxu0 0.0
        %316 = vmatprep.subr.mxu0 0.0
        %317 = vmatpush1.msra.mxu0 0.0
        %318 = vmatprep.subr.mxu0 0.0
        %319 = vmatpush1.msra.mxu0 0.0
        %320 = vmatprep.subr.mxu0 0.0
        %321 = vmatpush1.msra.mxu0 0.0
        %322 = vmatprep.subr.mxu0 0.0
        %323 = vmatpush1.msra.mxu0 0.0
        %324 = vmatprep.subr.mxu0 0.0
        %325 = vmatpush1.msra.mxu0 0.0
        %326 = vmatprep.subr.mxu0 0.0
        %327 = vmatpush1.msra.mxu0 0.0
        %328 = vmatprep.subr.mxu0 0.0
        %329 = vmatpush1.msra.mxu0 0.0
        %330 = vmatprep.subr.mxu0 0.0
        %331 = vmatpush1.msra.mxu0 0.0
        %332 = vmatprep.subr.mxu0 0.0
        %333 = vmatpush1.msra.mxu0 0.0
        %334 = vmatprep.subr.mxu0 0.0
        %335 = vmatpush1.msra.mxu0 0.0
        %336 = vmatprep.subr.mxu0 0.0
        %337 = vmatpush1.msra.mxu0 0.0
        %338 = vmatprep.mubr.f32.mxu0 0.0
        %339 = vmatmul.mubr.f32.gmra.mrb[0].mxu0 %v265
        %v340 = vpop.f32.mrb[0].mxu0
        %v341 = vadd.f32 0.0, %v340
        %v342 = vpop.f32.mrb[0].mxu0
        %343 = vmatprep.mubr.f32.mxu0 0.0
        %344 = vmatmul.mubr.f32.gmra.mrb[0].mxu0 %v268
        %v345 = vpop.f32.mrb[0].mxu0
        %v346 = vadd.f32 0.0, %v345
        %v347 = vpop.f32.mrb[0].mxu0
        %348 = vdwg.mxu0
        %v350 = vsel %vm263, %v341, 0
        %v353 = vsel %vm263, %v346, 0
        %v356 = vsel %vm270, %v261, 0
        %358 = vmatprep.subr.mxu0 0.0
        %359 = vmatpush1.msra.mxu0 %v356
        %360 = vmatprep.subr.mxu0 0.0
        %361 = vmatpush1.msra.mxu0 0.0
        %362 = vmatprep.subr.mxu0 0.0
        %363 = vmatpush1.msra.mxu0 0.0
        %364 = vmatprep.subr.mxu0 0.0
        %365 = vmatpush1.msra.mxu0 0.0
        %366 = vmatprep.subr.mxu0 0.0
        %367 = vmatpush1.msra.mxu0 0.0
        %368 = vmatprep.subr.mxu0 0.0
        %369 = vmatpush1.msra.mxu0 0.0
        %370 = vmatprep.subr.mxu0 0.0
        %371 = vmatpush1.msra.mxu0 0.0
        %372 = vmatprep.subr.mxu0 0.0
        %373 = vmatpush1.msra.mxu0 0.0
        %374 = vmatprep.subr.mxu0 0.0
        %375 = vmatpush1.msra.mxu0 0.0
        %376 = vmatprep.subr.mxu0 0.0
        %377 = vmatpush1.msra.mxu0 0.0
        %378 = vmatprep.subr.mxu0 0.0
        %379 = vmatpush1.msra.mxu0 0.0
        %380 = vmatprep.subr.mxu0 0.0
        %381 = vmatpush1.msra.mxu0 0.0
        %382 = vmatprep.subr.mxu0 0.0
        %383 = vmatpush1.msra.mxu0 0.0
        %384 = vmatprep.subr.mxu0 0.0
        %385 = vmatpush1.msra.mxu0 0.0
        %386 = vmatprep.subr.mxu0 0.0
        %387 = vmatpush1.msra.mxu0 0.0
        %388 = vmatprep.subr.mxu0 0.0
        %389 = vmatpush1.msra.mxu0 0.0
        %390 = vmatprep.subr.mxu0 0.0
        %391 = vmatpush1.msra.mxu0 0.0
        %392 = vmatprep.subr.mxu0 0.0
        %393 = vmatpush1.msra.mxu0 0.0
        %394 = vmatprep.subr.mxu0 0.0
        %395 = vmatpush1.msra.mxu0 0.0
        %396 = vmatprep.subr.mxu0 0.0
        %397 = vmatpush1.msra.mxu0 0.0
        %398 = vmatprep.subr.mxu0 0.0
        %399 = vmatpush1.msra.mxu0 0.0
        %400 = vmatprep.subr.mxu0 0.0
        %401 = vmatpush1.msra.mxu0 0.0
        %402 = vmatprep.subr.mxu0 0.0
        %403 = vmatpush1.msra.mxu0 0.0
        %404 = vmatprep.subr.mxu0 0.0
        %405 = vmatpush1.msra.mxu0 0.0
        %406 = vmatprep.subr.mxu0 0.0
        %407 = vmatpush1.msra.mxu0 0.0
        %408 = vmatprep.subr.mxu0 0.0
        %409 = vmatpush1.msra.mxu0 0.0
        %410 = vmatprep.subr.mxu0 0.0
        %411 = vmatpush1.msra.mxu0 0.0
        %412 = vmatprep.subr.mxu0 0.0
        %413 = vmatpush1.msra.mxu0 0.0
        %414 = vmatprep.subr.mxu0 0.0
        %415 = vmatpush1.msra.mxu0 0.0
        %416 = vmatprep.subr.mxu0 0.0
        %417 = vmatpush1.msra.mxu0 0.0
        %418 = vmatprep.subr.mxu0 0.0
        %419 = vmatpush1.msra.mxu0 0.0
        %420 = vmatprep.subr.mxu0 0.0
        %421 = vmatpush1.msra.mxu0 0.0
        %422 = vmatprep.mubr.f32.mxu0 0.0
        %423 = vmatmul.mubr.f32.gmra.mrb[0].mxu0 %v350
        %v424 = vpop.f32.mrb[0].mxu0
        %v425 = vadd.f32 0.0, %v424
        %v426 = vpop.f32.mrb[0].mxu0
        %427 = vmatprep.mubr.f32.mxu0 0.0
        %428 = vmatmul.mubr.f32.gmra.mrb[0].mxu0 %v353
        %v429 = vpop.f32.mrb[0].mxu0
        %v430 = vadd.f32 0.0, %v429
        %v431 = vpop.f32.mrb[0].mxu0
        %432 = vdwg.mxu0
        %vm433 = vcmask 130048
        %434 = vst.msk [vmem:[%s256] sm:$0xff] %vm433, %v425
        %435 = vst.msk [vmem:[%s256 + $0x8] sm:$0xff] %vm433, %v430
        %s436 = scalar_lea.vmem %s236, 4 [#allocation2]
        %v437 = vld [vmem:[%s436] sm:$0xf]
        %v439 = vsel %vm270, %v437, 0
        %441 = vmatprep.subr.mxu0 0.0
        %442 = vmatpush1.msra.mxu0 %v439
        %443 = vmatprep.subr.mxu0 0.0
        %444 = vmatpush1.msra.mxu0 0.0
        %445 = vmatprep.subr.mxu0 0.0
        %446 = vmatpush1.msra.mxu0 0.0
        %447 = vmatprep.subr.mxu0 0.0
        %448 = vmatpush1.msra.mxu0 0.0
        %449 = vmatprep.subr.mxu0 0.0
        %450 = vmatpush1.msra.mxu0 0.0
        %451 = vmatprep.subr.mxu0 0.0
        %452 = vmatpush1.msra.mxu0 0.0
        %453 = vmatprep.subr.mxu0 0.0
        %454 = vmatpush1.msra.mxu0 0.0
        %455 = vmatprep.subr.mxu0 0.0
        %456 = vmatpush1.msra.mxu0 0.0
        %457 = vmatprep.subr.mxu0 0.0
        %458 = vmatpush1.msra.mxu0 0.0
        %459 = vmatprep.subr.mxu0 0.0
        %460 = vmatpush1.msra.mxu0 0.0
        %461 = vmatprep.subr.mxu0 0.0
        %462 = vmatpush1.msra.mxu0 0.0
        %463 = vmatprep.subr.mxu0 0.0
        %464 = vmatpush1.msra.mxu0 0.0
        %465 = vmatprep.subr.mxu0 0.0
        %466 = vmatpush1.msra.mxu0 0.0
        %467 = vmatprep.subr.mxu0 0.0
        %468 = vmatpush1.msra.mxu0 0.0
        %469 = vmatprep.subr.mxu0 0.0
        %470 = vmatpush1.msra.mxu0 0.0
        %471 = vmatprep.subr.mxu0 0.0
        %472 = vmatpush1.msra.mxu0 0.0
        %473 = vmatprep.subr.mxu0 0.0
        %474 = vmatpush1.msra.mxu0 0.0
        %475 = vmatprep.subr.mxu0 0.0
        %476 = vmatpush1.msra.mxu0 0.0
        %477 = vmatprep.subr.mxu0 0.0
        %478 = vmatpush1.msra.mxu0 0.0
        %479 = vmatprep.subr.mxu0 0.0
        %480 = vmatpush1.msra.mxu0 0.0
        %481 = vmatprep.subr.mxu0 0.0
        %482 = vmatpush1.msra.mxu0 0.0
        %483 = vmatprep.subr.mxu0 0.0
        %484 = vmatpush1.msra.mxu0 0.0
        %485 = vmatprep.subr.mxu0 0.0
        %486 = vmatpush1.msra.mxu0 0.0
        %487 = vmatprep.subr.mxu0 0.0
        %488 = vmatpush1.msra.mxu0 0.0
        %489 = vmatprep.subr.mxu0 0.0
        %490 = vmatpush1.msra.mxu0 0.0
        %491 = vmatprep.subr.mxu0 0.0
        %492 = vmatpush1.msra.mxu0 0.0
        %493 = vmatprep.subr.mxu0 0.0
        %494 = vmatpush1.msra.mxu0 0.0
        %495 = vmatprep.subr.mxu0 0.0
        %496 = vmatpush1.msra.mxu0 0.0
        %497 = vmatprep.subr.mxu0 0.0
        %498 = vmatpush1.msra.mxu0 0.0
        %499 = vmatprep.subr.mxu0 0.0
        %500 = vmatpush1.msra.mxu0 0.0
        %501 = vmatprep.subr.mxu0 0.0
        %502 = vmatpush1.msra.mxu0 0.0
        %503 = vmatprep.subr.mxu0 0.0
        %504 = vmatpush1.msra.mxu0 0.0
        %505 = vmatprep.mubr.f32.mxu0 0.0
        %506 = vmatmul.mubr.f32.gmra.mrb[0].mxu0 %v265
        %v507 = vpop.f32.mrb[0].mxu0
        %v508 = vadd.f32 0.0, %v507
        %v509 = vpop.f32.mrb[0].mxu0
        %510 = vmatprep.mubr.f32.mxu0 0.0
        %511 = vmatmul.mubr.f32.gmra.mrb[0].mxu0 %v268
        %v512 = vpop.f32.mrb[0].mxu0
        %v513 = vadd.f32 0.0, %v512
        %v514 = vpop.f32.mrb[0].mxu0
        %515 = vdwg.mxu0
        %v517 = vsel %vm263, %v508, 0
        %v520 = vsel %vm263, %v513, 0
        %522 = vmatprep.subr.mxu0 0.0
        %523 = vmatpush1.msra.mxu0 %v356
        %524 = vmatprep.subr.mxu0 0.0
        %525 = vmatpush1.msra.mxu0 0.0
        %526 = vmatprep.subr.mxu0 0.0
        %527 = vmatpush1.msra.mxu0 0.0
        %528 = vmatprep.subr.mxu0 0.0
        %529 = vmatpush1.msra.mxu0 0.0
        %530 = vmatprep.subr.mxu0 0.0
        %531 = vmatpush1.msra.mxu0 0.0
        %532 = vmatprep.subr.mxu0 0.0
        %533 = vmatpush1.msra.mxu0 0.0
        %534 = vmatprep.subr.mxu0 0.0
        %535 = vmatpush1.msra.mxu0 0.0
        %536 = vmatprep.subr.mxu0 0.0
        %537 = vmatpush1.msra.mxu0 0.0
        %538 = vmatprep.subr.mxu0 0.0
        %539 = vmatpush1.msra.mxu0 0.0
        %540 = vmatprep.subr.mxu0 0.0
        %541 = vmatpush1.msra.mxu0 0.0
        %542 = vmatprep.subr.mxu0 0.0
        %543 = vmatpush1.msra.mxu0 0.0
        %544 = vmatprep.subr.mxu0 0.0
        %545 = vmatpush1.msra.mxu0 0.0
        %546 = vmatprep.subr.mxu0 0.0
        %547 = vmatpush1.msra.mxu0 0.0
        %548 = vmatprep.subr.mxu0 0.0
        %549 = vmatpush1.msra.mxu0 0.0
        %550 = vmatprep.subr.mxu0 0.0
        %551 = vmatpush1.msra.mxu0 0.0
        %552 = vmatprep.subr.mxu0 0.0
        %553 = vmatpush1.msra.mxu0 0.0
        %554 = vmatprep.subr.mxu0 0.0
        %555 = vmatpush1.msra.mxu0 0.0
        %556 = vmatprep.subr.mxu0 0.0
        %557 = vmatpush1.msra.mxu0 0.0
        %558 = vmatprep.subr.mxu0 0.0
        %559 = vmatpush1.msra.mxu0 0.0
        %560 = vmatprep.subr.mxu0 0.0
        %561 = vmatpush1.msra.mxu0 0.0
        %562 = vmatprep.subr.mxu0 0.0
        %563 = vmatpush1.msra.mxu0 0.0
        %564 = vmatprep.subr.mxu0 0.0
        %565 = vmatpush1.msra.mxu0 0.0
        %566 = vmatprep.subr.mxu0 0.0
        %567 = vmatpush1.msra.mxu0 0.0
        %568 = vmatprep.subr.mxu0 0.0
        %569 = vmatpush1.msra.mxu0 0.0
        %570 = vmatprep.subr.mxu0 0.0
        %571 = vmatpush1.msra.mxu0 0.0
        %572 = vmatprep.subr.mxu0 0.0
        %573 = vmatpush1.msra.mxu0 0.0
        %574 = vmatprep.subr.mxu0 0.0
        %575 = vmatpush1.msra.mxu0 0.0
        %576 = vmatprep.subr.mxu0 0.0
        %577 = vmatpush1.msra.mxu0 0.0
        %578 = vmatprep.subr.mxu0 0.0
        %579 = vmatpush1.msra.mxu0 0.0
        %580 = vmatprep.subr.mxu0 0.0
        %581 = vmatpush1.msra.mxu0 0.0
        %582 = vmatprep.subr.mxu0 0.0
        %583 = vmatpush1.msra.mxu0 0.0
        %584 = vmatprep.subr.mxu0 0.0
        %585 = vmatpush1.msra.mxu0 0.0
        %586 = vmatprep.mubr.f32.mxu0 0.0
        %587 = vmatmul.mubr.f32.gmra.mrb[0].mxu0 %v517
        %v588 = vpop.f32.mrb[0].mxu0
        %v589 = vadd.f32 0.0, %v588
        %v590 = vpop.f32.mrb[0].mxu0
        %591 = vmatprep.mubr.f32.mxu0 0.0
        %592 = vmatmul.mubr.f32.gmra.mrb[0].mxu0 %v520
        %v593 = vpop.f32.mrb[0].mxu0
        %v594 = vadd.f32 0.0, %v593
        %v595 = vpop.f32.mrb[0].mxu0
        %596 = vdwg.mxu0
        %s597 = scalar_lea.vmem %s256, 16 [#allocation3]
        %598 = vst.msk [vmem:[%s597] sm:$0xff] %vm433, %v589
        %599 = vst.msk [vmem:[%s597 + $0x8] sm:$0xff] %vm433, %v594
        %s600 = scalar_lea.vmem %s236, 8 [#allocation2]
        %v601 = vld [vmem:[%s600] sm:$0xf]
        %v603 = vsel %vm270, %v601, 0
        %605 = vmatprep.subr.mxu0 0.0
        %606 = vmatpush1.msra.mxu0 %v603
        %607 = vmatprep.subr.mxu0 0.0
        %608 = vmatpush1.msra.mxu0 0.0
        %609 = vmatprep.subr.mxu0 0.0
        %610 = vmatpush1.msra.mxu0 0.0
        %611 = vmatprep.subr.mxu0 0.0
        %612 = vmatpush1.msra.mxu0 0.0
        %613 = vmatprep.subr.mxu0 0.0
        %614 = vmatpush1.msra.mxu0 0.0
        %615 = vmatprep.subr.mxu0 0.0
        %616 = vmatpush1.msra.mxu0 0.0
        %617 = vmatprep.subr.mxu0 0.0
        %618 = vmatpush1.msra.mxu0 0.0
        %619 = vmatprep.subr.mxu0 0.0
        %620 = vmatpush1.msra.mxu0 0.0
        %621 = vmatprep.subr.mxu0 0.0
        %622 = vmatpush1.msra.mxu0 0.0
        %623 = vmatprep.subr.mxu0 0.0
        %624 = vmatpush1.msra.mxu0 0.0
        %625 = vmatprep.subr.mxu0 0.0
        %626 = vmatpush1.msra.mxu0 0.0
        %627 = vmatprep.subr.mxu0 0.0
        %628 = vmatpush1.msra.mxu0 0.0
        %629 = vmatprep.subr.mxu0 0.0
        %630 = vmatpush1.msra.mxu0 0.0
        %631 = vmatprep.subr.mxu0 0.0
        %632 = vmatpush1.msra.mxu0 0.0
        %633 = vmatprep.subr.mxu0 0.0
        %634 = vmatpush1.msra.mxu0 0.0
        %635 = vmatprep.subr.mxu0 0.0
        %636 = vmatpush1.msra.mxu0 0.0
        %637 = vmatprep.subr.mxu0 0.0
        %638 = vmatpush1.msra.mxu0 0.0
        %639 = vmatprep.subr.mxu0 0.0
        %640 = vmatpush1.msra.mxu0 0.0
        %641 = vmatprep.subr.mxu0 0.0
        %642 = vmatpush1.msra.mxu0 0.0
        %643 = vmatprep.subr.mxu0 0.0
        %644 = vmatpush1.msra.mxu0 0.0
        %645 = vmatprep.subr.mxu0 0.0
        %646 = vmatpush1.msra.mxu0 0.0
        %647 = vmatprep.subr.mxu0 0.0
        %648 = vmatpush1.msra.mxu0 0.0
        %649 = vmatprep.subr.mxu0 0.0
        %650 = vmatpush1.msra.mxu0 0.0
        %651 = vmatprep.subr.mxu0 0.0
        %652 = vmatpush1.msra.mxu0 0.0
        %653 = vmatprep.subr.mxu0 0.0
        %654 = vmatpush1.msra.mxu0 0.0
        %655 = vmatprep.subr.mxu0 0.0
        %656 = vmatpush1.msra.mxu0 0.0
        %657 = vmatprep.subr.mxu0 0.0
        %658 = vmatpush1.msra.mxu0 0.0
        %659 = vmatprep.subr.mxu0 0.0
        %660 = vmatpush1.msra.mxu0 0.0
        %661 = vmatprep.subr.mxu0 0.0
        %662 = vmatpush1.msra.mxu0 0.0
        %663 = vmatprep.subr.mxu0 0.0
        %664 = vmatpush1.msra.mxu0 0.0
        %665 = vmatprep.subr.mxu0 0.0
        %666 = vmatpush1.msra.mxu0 0.0
        %667 = vmatprep.subr.mxu0 0.0
        %668 = vmatpush1.msra.mxu0 0.0
        %669 = vmatprep.mubr.f32.mxu0 0.0
        %670 = vmatmul.mubr.f32.gmra.mrb[0].mxu0 %v265
        %v671 = vpop.f32.mrb[0].mxu0
        %v672 = vadd.f32 0.0, %v671
        %v673 = vpop.f32.mrb[0].mxu0
        %674 = vmatprep.mubr.f32.mxu0 0.0
        %675 = vmatmul.mubr.f32.gmra.mrb[0].mxu0 %v268
        %v676 = vpop.f32.mrb[0].mxu0
        %v677 = vadd.f32 0.0, %v676
        %v678 = vpop.f32.mrb[0].mxu0
        %679 = vdwg.mxu0
        %v681 = vsel %vm263, %v672, 0
        %v684 = vsel %vm263, %v677, 0
        %686 = vmatprep.subr.mxu0 0.0
        %687 = vmatpush1.msra.mxu0 %v356
        %688 = vmatprep.subr.mxu0 0.0
        %689 = vmatpush1.msra.mxu0 0.0
        %690 = vmatprep.subr.mxu0 0.0
        %691 = vmatpush1.msra.mxu0 0.0
        %692 = vmatprep.subr.mxu0 0.0
        %693 = vmatpush1.msra.mxu0 0.0
        %694 = vmatprep.subr.mxu0 0.0
        %695 = vmatpush1.msra.mxu0 0.0
        %696 = vmatprep.subr.mxu0 0.0
        %697 = vmatpush1.msra.mxu0 0.0
        %698 = vmatprep.subr.mxu0 0.0
        %699 = vmatpush1.msra.mxu0 0.0
        %700 = vmatprep.subr.mxu0 0.0
        %701 = vmatpush1.msra.mxu0 0.0
        %702 = vmatprep.subr.mxu0 0.0
        %703 = vmatpush1.msra.mxu0 0.0
        %704 = vmatprep.subr.mxu0 0.0
        %705 = vmatpush1.msra.mxu0 0.0
        %706 = vmatprep.subr.mxu0 0.0
        %707 = vmatpush1.msra.mxu0 0.0
        %708 = vmatprep.subr.mxu0 0.0
        %709 = vmatpush1.msra.mxu0 0.0
        %710 = vmatprep.subr.mxu0 0.0
        %711 = vmatpush1.msra.mxu0 0.0
        %712 = vmatprep.subr.mxu0 0.0
        %713 = vmatpush1.msra.mxu0 0.0
        %714 = vmatprep.subr.mxu0 0.0
        %715 = vmatpush1.msra.mxu0 0.0
        %716 = vmatprep.subr.mxu0 0.0
        %717 = vmatpush1.msra.mxu0 0.0
        %718 = vmatprep.subr.mxu0 0.0
        %719 = vmatpush1.msra.mxu0 0.0
        %720 = vmatprep.subr.mxu0 0.0
        %721 = vmatpush1.msra.mxu0 0.0
        %722 = vmatprep.subr.mxu0 0.0
        %723 = vmatpush1.msra.mxu0 0.0
        %724 = vmatprep.subr.mxu0 0.0
        %725 = vmatpush1.msra.mxu0 0.0
        %726 = vmatprep.subr.mxu0 0.0
        %727 = vmatpush1.msra.mxu0 0.0
        %728 = vmatprep.subr.mxu0 0.0
        %729 = vmatpush1.msra.mxu0 0.0
        %730 = vmatprep.subr.mxu0 0.0
        %731 = vmatpush1.msra.mxu0 0.0
        %732 = vmatprep.subr.mxu0 0.0
        %733 = vmatpush1.msra.mxu0 0.0
        %734 = vmatprep.subr.mxu0 0.0
        %735 = vmatpush1.msra.mxu0 0.0
        %736 = vmatprep.subr.mxu0 0.0
        %737 = vmatpush1.msra.mxu0 0.0
        %738 = vmatprep.subr.mxu0 0.0
        %739 = vmatpush1.msra.mxu0 0.0
        %740 = vmatprep.subr.mxu0 0.0
        %741 = vmatpush1.msra.mxu0 0.0
        %742 = vmatprep.subr.mxu0 0.0
        %743 = vmatpush1.msra.mxu0 0.0
        %744 = vmatprep.subr.mxu0 0.0
        %745 = vmatpush1.msra.mxu0 0.0
        %746 = vmatprep.subr.mxu0 0.0
        %747 = vmatpush1.msra.mxu0 0.0
        %748 = vmatprep.subr.mxu0 0.0
        %749 = vmatpush1.msra.mxu0 0.0
        %750 = vmatprep.mubr.f32.mxu0 0.0
        %751 = vmatmul.mubr.f32.gmra.mrb[0].mxu0 %v681
        %v752 = vpop.f32.mrb[0].mxu0
        %v753 = vadd.f32 0.0, %v752
        %v754 = vpop.f32.mrb[0].mxu0
        %755 = vmatprep.mubr.f32.mxu0 0.0
        %756 = vmatmul.mubr.f32.gmra.mrb[0].mxu0 %v684
        %v757 = vpop.f32.mrb[0].mxu0
        %v758 = vadd.f32 0.0, %v757
        %v759 = vpop.f32.mrb[0].mxu0
        %760 = vdwg.mxu0
        %s761 = scalar_lea.vmem %s256, 32 [#allocation3]
        %762 = vst.msk [vmem:[%s761] sm:$0xff] %vm433, %v753
        %763 = vst.msk [vmem:[%s761 + $0x8] sm:$0xff] %vm433, %v758
        %s764 = scalar_lea.vmem %s236, 12 [#allocation2]
        %v765 = vld [vmem:[%s764] sm:$0xf]
        %v767 = vsel %vm270, %v765, 0
        %769 = vmatprep.subr.mxu0 0.0
        %770 = vmatpush1.msra.mxu0 %v767
        %771 = vmatprep.subr.mxu0 0.0
        %772 = vmatpush1.msra.mxu0 0.0
        %773 = vmatprep.subr.mxu0 0.0
        %774 = vmatpush1.msra.mxu0 0.0
        %775 = vmatprep.subr.mxu0 0.0
        %776 = vmatpush1.msra.mxu0 0.0
        %777 = vmatprep.subr.mxu0 0.0
        %778 = vmatpush1.msra.mxu0 0.0
        %779 = vmatprep.subr.mxu0 0.0
        %780 = vmatpush1.msra.mxu0 0.0
        %781 = vmatprep.subr.mxu0 0.0
        %782 = vmatpush1.msra.mxu0 0.0
        %783 = vmatprep.subr.mxu0 0.0
        %784 = vmatpush1.msra.mxu0 0.0
        %785 = vmatprep.subr.mxu0 0.0
        %786 = vmatpush1.msra.mxu0 0.0
        %787 = vmatprep.subr.mxu0 0.0
        %788 = vmatpush1.msra.mxu0 0.0
        %789 = vmatprep.subr.mxu0 0.0
        %790 = vmatpush1.msra.mxu0 0.0
        %791 = vmatprep.subr.mxu0 0.0
        %792 = vmatpush1.msra.mxu0 0.0
        %793 = vmatprep.subr.mxu0 0.0
        %794 = vmatpush1.msra.mxu0 0.0
        %795 = vmatprep.subr.mxu0 0.0
        %796 = vmatpush1.msra.mxu0 0.0
        %797 = vmatprep.subr.mxu0 0.0
        %798 = vmatpush1.msra.mxu0 0.0
        %799 = vmatprep.subr.mxu0 0.0
        %800 = vmatpush1.msra.mxu0 0.0
        %801 = vmatprep.subr.mxu0 0.0
        %802 = vmatpush1.msra.mxu0 0.0
        %803 = vmatprep.subr.mxu0 0.0
        %804 = vmatpush1.msra.mxu0 0.0
        %805 = vmatprep.subr.mxu0 0.0
        %806 = vmatpush1.msra.mxu0 0.0
        %807 = vmatprep.subr.mxu0 0.0
        %808 = vmatpush1.msra.mxu0 0.0
        %809 = vmatprep.subr.mxu0 0.0
        %810 = vmatpush1.msra.mxu0 0.0
        %811 = vmatprep.subr.mxu0 0.0
        %812 = vmatpush1.msra.mxu0 0.0
        %813 = vmatprep.subr.mxu0 0.0
        %814 = vmatpush1.msra.mxu0 0.0
        %815 = vmatprep.subr.mxu0 0.0
        %816 = vmatpush1.msra.mxu0 0.0
        %817 = vmatprep.subr.mxu0 0.0
        %818 = vmatpush1.msra.mxu0 0.0
        %819 = vmatprep.subr.mxu0 0.0
        %820 = vmatpush1.msra.mxu0 0.0
        %821 = vmatprep.subr.mxu0 0.0
        %822 = vmatpush1.msra.mxu0 0.0
        %823 = vmatprep.subr.mxu0 0.0
        %824 = vmatpush1.msra.mxu0 0.0
        %825 = vmatprep.subr.mxu0 0.0
        %826 = vmatpush1.msra.mxu0 0.0
        %827 = vmatprep.subr.mxu0 0.0
        %828 = vmatpush1.msra.mxu0 0.0
        %829 = vmatprep.subr.mxu0 0.0
        %830 = vmatpush1.msra.mxu0 0.0
        %831 = vmatprep.subr.mxu0 0.0
        %832 = vmatpush1.msra.mxu0 0.0
        %833 = vmatprep.mubr.f32.mxu0 0.0
        %834 = vmatmul.mubr.f32.gmra.mrb[0].mxu0 %v265
        %v835 = vpop.f32.mrb[0].mxu0
        %v836 = vadd.f32 0.0, %v835
        %v837 = vpop.f32.mrb[0].mxu0
        %838 = vmatprep.mubr.f32.mxu0 0.0
        %839 = vmatmul.mubr.f32.gmra.mrb[0].mxu0 %v268
        %v840 = vpop.f32.mrb[0].mxu0
        %v841 = vadd.f32 0.0, %v840
        %v842 = vpop.f32.mrb[0].mxu0
        %843 = vdwg.mxu0
        %v845 = vsel %vm263, %v836, 0
        %v848 = vsel %vm263, %v841, 0
        %850 = vmatprep.subr.mxu0 0.0
        %851 = vmatpush1.msra.mxu0 %v356
        %852 = vmatprep.subr.mxu0 0.0
        %853 = vmatpush1.msra.mxu0 0.0
        %854 = vmatprep.subr.mxu0 0.0
        %855 = vmatpush1.msra.mxu0 0.0
        %856 = vmatprep.subr.mxu0 0.0
        %857 = vmatpush1.msra.mxu0 0.0
        %858 = vmatprep.subr.mxu0 0.0
        %859 = vmatpush1.msra.mxu0 0.0
        %860 = vmatprep.subr.mxu0 0.0
        %861 = vmatpush1.msra.mxu0 0.0
        %862 = vmatprep.subr.mxu0 0.0
        %863 = vmatpush1.msra.mxu0 0.0
        %864 = vmatprep.subr.mxu0 0.0
        %865 = vmatpush1.msra.mxu0 0.0
        %866 = vmatprep.subr.mxu0 0.0
        %867 = vmatpush1.msra.mxu0 0.0
        %868 = vmatprep.subr.mxu0 0.0
        %869 = vmatpush1.msra.mxu0 0.0
        %870 = vmatprep.subr.mxu0 0.0
        %871 = vmatpush1.msra.mxu0 0.0
        %872 = vmatprep.subr.mxu0 0.0
        %873 = vmatpush1.msra.mxu0 0.0
        %874 = vmatprep.subr.mxu0 0.0
        %875 = vmatpush1.msra.mxu0 0.0
        %876 = vmatprep.subr.mxu0 0.0
        %877 = vmatpush1.msra.mxu0 0.0
        %878 = vmatprep.subr.mxu0 0.0
        %879 = vmatpush1.msra.mxu0 0.0
        %880 = vmatprep.subr.mxu0 0.0
        %881 = vmatpush1.msra.mxu0 0.0
        %882 = vmatprep.subr.mxu0 0.0
        %883 = vmatpush1.msra.mxu0 0.0
        %884 = vmatprep.subr.mxu0 0.0
        %885 = vmatpush1.msra.mxu0 0.0
        %886 = vmatprep.subr.mxu0 0.0
        %887 = vmatpush1.msra.mxu0 0.0
        %888 = vmatprep.subr.mxu0 0.0
        %889 = vmatpush1.msra.mxu0 0.0
        %890 = vmatprep.subr.mxu0 0.0
        %891 = vmatpush1.msra.mxu0 0.0
        %892 = vmatprep.subr.mxu0 0.0
        %893 = vmatpush1.msra.mxu0 0.0
        %894 = vmatprep.subr.mxu0 0.0
        %895 = vmatpush1.msra.mxu0 0.0
        %896 = vmatprep.subr.mxu0 0.0
        %897 = vmatpush1.msra.mxu0 0.0
        %898 = vmatprep.subr.mxu0 0.0
        %899 = vmatpush1.msra.mxu0 0.0
        %900 = vmatprep.subr.mxu0 0.0
        %901 = vmatpush1.msra.mxu0 0.0
        %902 = vmatprep.subr.mxu0 0.0
        %903 = vmatpush1.msra.mxu0 0.0
        %904 = vmatprep.subr.mxu0 0.0
        %905 = vmatpush1.msra.mxu0 0.0
        %906 = vmatprep.subr.mxu0 0.0
        %907 = vmatpush1.msra.mxu0 0.0
        %908 = vmatprep.subr.mxu0 0.0
        %909 = vmatpush1.msra.mxu0 0.0
        %910 = vmatprep.subr.mxu0 0.0
        %911 = vmatpush1.msra.mxu0 0.0
        %912 = vmatprep.subr.mxu0 0.0
        %913 = vmatpush1.msra.mxu0 0.0
        %914 = vmatprep.mubr.f32.mxu0 0.0
        %915 = vmatmul.mubr.f32.gmra.mrb[0].mxu0 %v845
        %v916 = vpop.f32.mrb[0].mxu0
        %v917 = vadd.f32 0.0, %v916
        %v918 = vpop.f32.mrb[0].mxu0
        %919 = vmatprep.mubr.f32.mxu0 0.0
        %920 = vmatmul.mubr.f32.gmra.mrb[0].mxu0 %v848
        %v921 = vpop.f32.mrb[0].mxu0
        %v922 = vadd.f32 0.0, %v921
        %v923 = vpop.f32.mrb[0].mxu0
        %924 = vdwg.mxu0
        %s925 = scalar_lea.vmem %s256, 48 [#allocation3]
        %926 = vst.msk [vmem:[%s925] sm:$0xff] %vm433, %v917
        %927 = vst.msk [vmem:[%s925 + $0x8] sm:$0xff] %vm433, %v922
        %s928 = scalar_lea.vmem %s236, 16 [#allocation2]
        %v929 = vld [vmem:[%s928] sm:$0xf]
        %v931 = vsel %vm270, %v929, 0
        %933 = vmatprep.subr.mxu0 0.0
        %934 = vmatpush1.msra.mxu0 %v931
        %935 = vmatprep.subr.mxu0 0.0
        %936 = vmatpush1.msra.mxu0 0.0
        %937 = vmatprep.subr.mxu0 0.0
        %938 = vmatpush1.msra.mxu0 0.0
        %939 = vmatprep.subr.mxu0 0.0
        %940 = vmatpush1.msra.mxu0 0.0
        %941 = vmatprep.subr.mxu0 0.0
        %942 = vmatpush1.msra.mxu0 0.0
        %943 = vmatprep.subr.mxu0 0.0
        %944 = vmatpush1.msra.mxu0 0.0
        %945 = vmatprep.subr.mxu0 0.0
        %946 = vmatpush1.msra.mxu0 0.0
        %947 = vmatprep.subr.mxu0 0.0
        %948 = vmatpush1.msra.mxu0 0.0
        %949 = vmatprep.subr.mxu0 0.0
        %950 = vmatpush1.msra.mxu0 0.0
        %951 = vmatprep.subr.mxu0 0.0
        %952 = vmatpush1.msra.mxu0 0.0
        %953 = vmatprep.subr.mxu0 0.0
        %954 = vmatpush1.msra.mxu0 0.0
        %955 = vmatprep.subr.mxu0 0.0
        %956 = vmatpush1.msra.mxu0 0.0
        %957 = vmatprep.subr.mxu0 0.0
        %958 = vmatpush1.msra.mxu0 0.0
        %959 = vmatprep.subr.mxu0 0.0
        %960 = vmatpush1.msra.mxu0 0.0
        %961 = vmatprep.subr.mxu0 0.0
        %962 = vmatpush1.msra.mxu0 0.0
        %963 = vmatprep.subr.mxu0 0.0
        %964 = vmatpush1.msra.mxu0 0.0
        %965 = vmatprep.subr.mxu0 0.0
        %966 = vmatpush1.msra.mxu0 0.0
        %967 = vmatprep.subr.mxu0 0.0
        %968 = vmatpush1.msra.mxu0 0.0
        %969 = vmatprep.subr.mxu0 0.0
        %970 = vmatpush1.msra.mxu0 0.0
        %971 = vmatprep.subr.mxu0 0.0
        %972 = vmatpush1.msra.mxu0 0.0
        %973 = vmatprep.subr.mxu0 0.0
        %974 = vmatpush1.msra.mxu0 0.0
        %975 = vmatprep.subr.mxu0 0.0
        %976 = vmatpush1.msra.mxu0 0.0
        %977 = vmatprep.subr.mxu0 0.0
        %978 = vmatpush1.msra.mxu0 0.0
        %979 = vmatprep.subr.mxu0 0.0
        %980 = vmatpush1.msra.mxu0 0.0
        %981 = vmatprep.subr.mxu0 0.0
        %982 = vmatpush1.msra.mxu0 0.0
        %983 = vmatprep.subr.mxu0 0.0
        %984 = vmatpush1.msra.mxu0 0.0
        %985 = vmatprep.subr.mxu0 0.0
        %986 = vmatpush1.msra.mxu0 0.0
        %987 = vmatprep.subr.mxu0 0.0
        %988 = vmatpush1.msra.mxu0 0.0
        %989 = vmatprep.subr.mxu0 0.0
        %990 = vmatpush1.msra.mxu0 0.0
        %991 = vmatprep.subr.mxu0 0.0
        %992 = vmatpush1.msra.mxu0 0.0
        %993 = vmatprep.subr.mxu0 0.0
        %994 = vmatpush1.msra.mxu0 0.0
        %995 = vmatprep.subr.mxu0 0.0
        %996 = vmatpush1.msra.mxu0 0.0
        %997 = vmatprep.mubr.f32.mxu0 0.0
        %998 = vmatmul.mubr.f32.gmra.mrb[0].mxu0 %v265
        %v999 = vpop.f32.mrb[0].mxu0
        %v1000 = vadd.f32 0.0, %v999
        %v1001 = vpop.f32.mrb[0].mxu0
        %1002 = vmatprep.mubr.f32.mxu0 0.0
        %1003 = vmatmul.mubr.f32.gmra.mrb[0].mxu0 %v268
        %v1004 = vpop.f32.mrb[0].mxu0
        %v1005 = vadd.f32 0.0, %v1004
        %v1006 = vpop.f32.mrb[0].mxu0
        %1007 = vdwg.mxu0
        %v1009 = vsel %vm263, %v1000, 0
        %v1012 = vsel %vm263, %v1005, 0
        %1014 = vmatprep.subr.mxu0 0.0
        %1015 = vmatpush1.msra.mxu0 %v356
        %1016 = vmatprep.subr.mxu0 0.0
        %1017 = vmatpush1.msra.mxu0 0.0
        %1018 = vmatprep.subr.mxu0 0.0
        %1019 = vmatpush1.msra.mxu0 0.0
        %1020 = vmatprep.subr.mxu0 0.0
        %1021 = vmatpush1.msra.mxu0 0.0
        %1022 = vmatprep.subr.mxu0 0.0
        %1023 = vmatpush1.msra.mxu0 0.0
        %1024 = vmatprep.subr.mxu0 0.0
        %1025 = vmatpush1.msra.mxu0 0.0
        %1026 = vmatprep.subr.mxu0 0.0
        %1027 = vmatpush1.msra.mxu0 0.0
        %1028 = vmatprep.subr.mxu0 0.0
        %1029 = vmatpush1.msra.mxu0 0.0
        %1030 = vmatprep.subr.mxu0 0.0
        %1031 = vmatpush1.msra.mxu0 0.0
        %1032 = vmatprep.subr.mxu0 0.0
        %1033 = vmatpush1.msra.mxu0 0.0
        %1034 = vmatprep.subr.mxu0 0.0
        %1035 = vmatpush1.msra.mxu0 0.0
        %1036 = vmatprep.subr.mxu0 0.0
        %1037 = vmatpush1.msra.mxu0 0.0
        %1038 = vmatprep.subr.mxu0 0.0
        %1039 = vmatpush1.msra.mxu0 0.0
        %1040 = vmatprep.subr.mxu0 0.0
        %1041 = vmatpush1.msra.mxu0 0.0
        %1042 = vmatprep.subr.mxu0 0.0
        %1043 = vmatpush1.msra.mxu0 0.0
        %1044 = vmatprep.subr.mxu0 0.0
        %1045 = vmatpush1.msra.mxu0 0.0
        %1046 = vmatprep.subr.mxu0 0.0
        %1047 = vmatpush1.msra.mxu0 0.0
        %1048 = vmatprep.subr.mxu0 0.0
        %1049 = vmatpush1.msra.mxu0 0.0
        %1050 = vmatprep.subr.mxu0 0.0
        %1051 = vmatpush1.msra.mxu0 0.0
        %1052 = vmatprep.subr.mxu0 0.0
        %1053 = vmatpush1.msra.mxu0 0.0
        %1054 = vmatprep.subr.mxu0 0.0
        %1055 = vmatpush1.msra.mxu0 0.0
        %1056 = vmatprep.subr.mxu0 0.0
        %1057 = vmatpush1.msra.mxu0 0.0
        %1058 = vmatprep.subr.mxu0 0.0
        %1059 = vmatpush1.msra.mxu0 0.0
        %1060 = vmatprep.subr.mxu0 0.0
        %1061 = vmatpush1.msra.mxu0 0.0
        %1062 = vmatprep.subr.mxu0 0.0
        %1063 = vmatpush1.msra.mxu0 0.0
        %1064 = vmatprep.subr.mxu0 0.0
        %1065 = vmatpush1.msra.mxu0 0.0
        %1066 = vmatprep.subr.mxu0 0.0
        %1067 = vmatpush1.msra.mxu0 0.0
        %1068 = vmatprep.subr.mxu0 0.0
        %1069 = vmatpush1.msra.mxu0 0.0
        %1070 = vmatprep.subr.mxu0 0.0
        %1071 = vmatpush1.msra.mxu0 0.0
        %1072 = vmatprep.subr.mxu0 0.0
        %1073 = vmatpush1.msra.mxu0 0.0
        %1074 = vmatprep.subr.mxu0 0.0
        %1075 = vmatpush1.msra.mxu0 0.0
        %1076 = vmatprep.subr.mxu0 0.0
        %1077 = vmatpush1.msra.mxu0 0.0
        %1078 = vmatprep.mubr.f32.mxu0 0.0
        %1079 = vmatmul.mubr.f32.gmra.mrb[0].mxu0 %v1009
        %v1080 = vpop.f32.mrb[0].mxu0
        %v1081 = vadd.f32 0.0, %v1080
        %v1082 = vpop.f32.mrb[0].mxu0
        %1083 = vmatprep.mubr.f32.mxu0 0.0
        %1084 = vmatmul.mubr.f32.gmra.mrb[0].mxu0 %v1012
        %v1085 = vpop.f32.mrb[0].mxu0
        %v1086 = vadd.f32 0.0, %v1085
        %v1087 = vpop.f32.mrb[0].mxu0
        %1088 = vdwg.mxu0
        %s1089 = scalar_lea.vmem %s256, 64 [#allocation3]
        %1090 = vst.msk [vmem:[%s1089] sm:$0xff] %vm433, %v1081
        %1091 = vst.msk [vmem:[%s1089 + $0x8] sm:$0xff] %vm433, %v1086
        %s1092 = scalar_lea.vmem %s236, 20 [#allocation2]
        %v1093 = vld [vmem:[%s1092] sm:$0xf]
        %v1095 = vsel %vm270, %v1093, 0
        %1097 = vmatprep.subr.mxu0 0.0
        %1098 = vmatpush1.msra.mxu0 %v1095
        %1099 = vmatprep.subr.mxu0 0.0
        %1100 = vmatpush1.msra.mxu0 0.0
        %1101 = vmatprep.subr.mxu0 0.0
        %1102 = vmatpush1.msra.mxu0 0.0
        %1103 = vmatprep.subr.mxu0 0.0
        %1104 = vmatpush1.msra.mxu0 0.0
        %1105 = vmatprep.subr.mxu0 0.0
        %1106 = vmatpush1.msra.mxu0 0.0
        %1107 = vmatprep.subr.mxu0 0.0
        %1108 = vmatpush1.msra.mxu0 0.0
        %1109 = vmatprep.subr.mxu0 0.0
        %1110 = vmatpush1.msra.mxu0 0.0
        %1111 = vmatprep.subr.mxu0 0.0
        %1112 = vmatpush1.msra.mxu0 0.0
        %1113 = vmatprep.subr.mxu0 0.0
        %1114 = vmatpush1.msra.mxu0 0.0
        %1115 = vmatprep.subr.mxu0 0.0
        %1116 = vmatpush1.msra.mxu0 0.0
        %1117 = vmatprep.subr.mxu0 0.0
        %1118 = vmatpush1.msra.mxu0 0.0
        %1119 = vmatprep.subr.mxu0 0.0
        %1120 = vmatpush1.msra.mxu0 0.0
        %1121 = vmatprep.subr.mxu0 0.0
        %1122 = vmatpush1.msra.mxu0 0.0
        %1123 = vmatprep.subr.mxu0 0.0
        %1124 = vmatpush1.msra.mxu0 0.0
        %1125 = vmatprep.subr.mxu0 0.0
        %1126 = vmatpush1.msra.mxu0 0.0
        %1127 = vmatprep.subr.mxu0 0.0
        %1128 = vmatpush1.msra.mxu0 0.0
        %1129 = vmatprep.subr.mxu0 0.0
        %1130 = vmatpush1.msra.mxu0 0.0
        %1131 = vmatprep.subr.mxu0 0.0
        %1132 = vmatpush1.msra.mxu0 0.0
        %1133 = vmatprep.subr.mxu0 0.0
        %1134 = vmatpush1.msra.mxu0 0.0
        %1135 = vmatprep.subr.mxu0 0.0
        %1136 = vmatpush1.msra.mxu0 0.0
        %1137 = vmatprep.subr.mxu0 0.0
        %1138 = vmatpush1.msra.mxu0 0.0
        %1139 = vmatprep.subr.mxu0 0.0
        %1140 = vmatpush1.msra.mxu0 0.0
        %1141 = vmatprep.subr.mxu0 0.0
        %1142 = vmatpush1.msra.mxu0 0.0
        %1143 = vmatprep.subr.mxu0 0.0
        %1144 = vmatpush1.msra.mxu0 0.0
        %1145 = vmatprep.subr.mxu0 0.0
        %1146 = vmatpush1.msra.mxu0 0.0
        %1147 = vmatprep.subr.mxu0 0.0
        %1148 = vmatpush1.msra.mxu0 0.0
        %1149 = vmatprep.subr.mxu0 0.0
        %1150 = vmatpush1.msra.mxu0 0.0
        %1151 = vmatprep.subr.mxu0 0.0
        %1152 = vmatpush1.msra.mxu0 0.0
        %1153 = vmatprep.subr.mxu0 0.0
        %1154 = vmatpush1.msra.mxu0 0.0
        %1155 = vmatprep.subr.mxu0 0.0
        %1156 = vmatpush1.msra.mxu0 0.0
        %1157 = vmatprep.subr.mxu0 0.0
        %1158 = vmatpush1.msra.mxu0 0.0
        %1159 = vmatprep.subr.mxu0 0.0
        %1160 = vmatpush1.msra.mxu0 0.0
        %1161 = vmatprep.mubr.f32.mxu0 0.0
        %1162 = vmatmul.mubr.f32.gmra.mrb[0].mxu0 %v265
        %v1163 = vpop.f32.mrb[0].mxu0
        %v1164 = vadd.f32 0.0, %v1163
        %v1165 = vpop.f32.mrb[0].mxu0
        %1166 = vmatprep.mubr.f32.mxu0 0.0
        %1167 = vmatmul.mubr.f32.gmra.mrb[0].mxu0 %v268
        %v1168 = vpop.f32.mrb[0].mxu0
        %v1169 = vadd.f32 0.0, %v1168
        %v1170 = vpop.f32.mrb[0].mxu0
        %1171 = vdwg.mxu0
        %v1173 = vsel %vm263, %v1164, 0
        %v1176 = vsel %vm263, %v1169, 0
        %1178 = vmatprep.subr.mxu0 0.0
        %1179 = vmatpush1.msra.mxu0 %v356
        %1180 = vmatprep.subr.mxu0 0.0
        %1181 = vmatpush1.msra.mxu0 0.0
        %1182 = vmatprep.subr.mxu0 0.0
        %1183 = vmatpush1.msra.mxu0 0.0
        %1184 = vmatprep.subr.mxu0 0.0
        %1185 = vmatpush1.msra.mxu0 0.0
        %1186 = vmatprep.subr.mxu0 0.0
        %1187 = vmatpush1.msra.mxu0 0.0
        %1188 = vmatprep.subr.mxu0 0.0
        %1189 = vmatpush1.msra.mxu0 0.0
        %1190 = vmatprep.subr.mxu0 0.0
        %1191 = vmatpush1.msra.mxu0 0.0
        %1192 = vmatprep.subr.mxu0 0.0
        %1193 = vmatpush1.msra.mxu0 0.0
        %1194 = vmatprep.subr.mxu0 0.0
        %1195 = vmatpush1.msra.mxu0 0.0
        %1196 = vmatprep.subr.mxu0 0.0
        %1197 = vmatpush1.msra.mxu0 0.0
        %1198 = vmatprep.subr.mxu0 0.0
        %1199 = vmatpush1.msra.mxu0 0.0
        %1200 = vmatprep.subr.mxu0 0.0
        %1201 = vmatpush1.msra.mxu0 0.0
        %1202 = vmatprep.subr.mxu0 0.0
        %1203 = vmatpush1.msra.mxu0 0.0
        %1204 = vmatprep.subr.mxu0 0.0
        %1205 = vmatpush1.msra.mxu0 0.0
        %1206 = vmatprep.subr.mxu0 0.0
        %1207 = vmatpush1.msra.mxu0 0.0
        %1208 = vmatprep.subr.mxu0 0.0
        %1209 = vmatpush1.msra.mxu0 0.0
        %1210 = vmatprep.subr.mxu0 0.0
        %1211 = vmatpush1.msra.mxu0 0.0
        %1212 = vmatprep.subr.mxu0 0.0
        %1213 = vmatpush1.msra.mxu0 0.0
        %1214 = vmatprep.subr.mxu0 0.0
        %1215 = vmatpush1.msra.mxu0 0.0
        %1216 = vmatprep.subr.mxu0 0.0
        %1217 = vmatpush1.msra.mxu0 0.0
        %1218 = vmatprep.subr.mxu0 0.0
        %1219 = vmatpush1.msra.mxu0 0.0
        %1220 = vmatprep.subr.mxu0 0.0
        %1221 = vmatpush1.msra.mxu0 0.0
        %1222 = vmatprep.subr.mxu0 0.0
        %1223 = vmatpush1.msra.mxu0 0.0
        %1224 = vmatprep.subr.mxu0 0.0
        %1225 = vmatpush1.msra.mxu0 0.0
        %1226 = vmatprep.subr.mxu0 0.0
        %1227 = vmatpush1.msra.mxu0 0.0
        %1228 = vmatprep.subr.mxu0 0.0
        %1229 = vmatpush1.msra.mxu0 0.0
        %1230 = vmatprep.subr.mxu0 0.0
        %1231 = vmatpush1.msra.mxu0 0.0
        %1232 = vmatprep.subr.mxu0 0.0
        %1233 = vmatpush1.msra.mxu0 0.0
        %1234 = vmatprep.subr.mxu0 0.0
        %1235 = vmatpush1.msra.mxu0 0.0
        %1236 = vmatprep.subr.mxu0 0.0
        %1237 = vmatpush1.msra.mxu0 0.0
        %1238 = vmatprep.subr.mxu0 0.0
        %1239 = vmatpush1.msra.mxu0 0.0
        %1240 = vmatprep.subr.mxu0 0.0
        %1241 = vmatpush1.msra.mxu0 0.0
        %1242 = vmatprep.mubr.f32.mxu0 0.0
        %1243 = vmatmul.mubr.f32.gmra.mrb[0].mxu0 %v1173
        %v1244 = vpop.f32.mrb[0].mxu0
        %v1245 = vadd.f32 0.0, %v1244
        %v1246 = vpop.f32.mrb[0].mxu0
        %1247 = vmatprep.mubr.f32.mxu0 0.0
        %1248 = vmatmul.mubr.f32.gmra.mrb[0].mxu0 %v1176
        %v1249 = vpop.f32.mrb[0].mxu0
        %v1250 = vadd.f32 0.0, %v1249
        %v1251 = vpop.f32.mrb[0].mxu0
        %1252 = vdwg.mxu0
        %s1253 = scalar_lea.vmem %s256, 80 [#allocation3]
        %1254 = vst.msk [vmem:[%s1253] sm:$0xff] %vm433, %v1245
        %1255 = vst.msk [vmem:[%s1253 + $0x8] sm:$0xff] %vm433, %v1250
        %s1256 = scalar_lea.vmem %s236, 24 [#allocation2]
        %v1257 = vld [vmem:[%s1256] sm:$0xf]
        %v1259 = vsel %vm270, %v1257, 0
        %1261 = vmatprep.subr.mxu0 0.0
        %1262 = vmatpush1.msra.mxu0 %v1259
        %1263 = vmatprep.subr.mxu0 0.0
        %1264 = vmatpush1.msra.mxu0 0.0
        %1265 = vmatprep.subr.mxu0 0.0
        %1266 = vmatpush1.msra.mxu0 0.0
        %1267 = vmatprep.subr.mxu0 0.0
        %1268 = vmatpush1.msra.mxu0 0.0
        %1269 = vmatprep.subr.mxu0 0.0
        %1270 = vmatpush1.msra.mxu0 0.0
        %1271 = vmatprep.subr.mxu0 0.0
        %1272 = vmatpush1.msra.mxu0 0.0
        %1273 = vmatprep.subr.mxu0 0.0
        %1274 = vmatpush1.msra.mxu0 0.0
        %1275 = vmatprep.subr.mxu0 0.0
        %1276 = vmatpush1.msra.mxu0 0.0
        %1277 = vmatprep.subr.mxu0 0.0
        %1278 = vmatpush1.msra.mxu0 0.0
        %1279 = vmatprep.subr.mxu0 0.0
        %1280 = vmatpush1.msra.mxu0 0.0
        %1281 = vmatprep.subr.mxu0 0.0
        %1282 = vmatpush1.msra.mxu0 0.0
        %1283 = vmatprep.subr.mxu0 0.0
        %1284 = vmatpush1.msra.mxu0 0.0
        %1285 = vmatprep.subr.mxu0 0.0
        %1286 = vmatpush1.msra.mxu0 0.0
        %1287 = vmatprep.subr.mxu0 0.0
        %1288 = vmatpush1.msra.mxu0 0.0
        %1289 = vmatprep.subr.mxu0 0.0
        %1290 = vmatpush1.msra.mxu0 0.0
        %1291 = vmatprep.subr.mxu0 0.0
        %1292 = vmatpush1.msra.mxu0 0.0
        %1293 = vmatprep.subr.mxu0 0.0
        %1294 = vmatpush1.msra.mxu0 0.0
        %1295 = vmatprep.subr.mxu0 0.0
        %1296 = vmatpush1.msra.mxu0 0.0
        %1297 = vmatprep.subr.mxu0 0.0
        %1298 = vmatpush1.msra.mxu0 0.0
        %1299 = vmatprep.subr.mxu0 0.0
        %1300 = vmatpush1.msra.mxu0 0.0
        %1301 = vmatprep.subr.mxu0 0.0
        %1302 = vmatpush1.msra.mxu0 0.0
        %1303 = vmatprep.subr.mxu0 0.0
        %1304 = vmatpush1.msra.mxu0 0.0
        %1305 = vmatprep.subr.mxu0 0.0
        %1306 = vmatpush1.msra.mxu0 0.0
        %1307 = vmatprep.subr.mxu0 0.0
        %1308 = vmatpush1.msra.mxu0 0.0
        %1309 = vmatprep.subr.mxu0 0.0
        %1310 = vmatpush1.msra.mxu0 0.0
        %1311 = vmatprep.subr.mxu0 0.0
        %1312 = vmatpush1.msra.mxu0 0.0
        %1313 = vmatprep.subr.mxu0 0.0
        %1314 = vmatpush1.msra.mxu0 0.0
        %1315 = vmatprep.subr.mxu0 0.0
        %1316 = vmatpush1.msra.mxu0 0.0
        %1317 = vmatprep.subr.mxu0 0.0
        %1318 = vmatpush1.msra.mxu0 0.0
        %1319 = vmatprep.subr.mxu0 0.0
        %1320 = vmatpush1.msra.mxu0 0.0
        %1321 = vmatprep.subr.mxu0 0.0
        %1322 = vmatpush1.msra.mxu0 0.0
        %1323 = vmatprep.subr.mxu0 0.0
        %1324 = vmatpush1.msra.mxu0 0.0
        %1325 = vmatprep.mubr.f32.mxu0 0.0
        %1326 = vmatmul.mubr.f32.gmra.mrb[0].mxu0 %v265
        %v1327 = vpop.f32.mrb[0].mxu0
        %v1328 = vadd.f32 0.0, %v1327
        %v1329 = vpop.f32.mrb[0].mxu0
        %1330 = vmatprep.mubr.f32.mxu0 0.0
        %1331 = vmatmul.mubr.f32.gmra.mrb[0].mxu0 %v268
        %v1332 = vpop.f32.mrb[0].mxu0
        %v1333 = vadd.f32 0.0, %v1332
        %v1334 = vpop.f32.mrb[0].mxu0
        %1335 = vdwg.mxu0
        %v1337 = vsel %vm263, %v1328, 0
        %v1340 = vsel %vm263, %v1333, 0
        %1342 = vmatprep.subr.mxu0 0.0
        %1343 = vmatpush1.msra.mxu0 %v356
        %1344 = vmatprep.subr.mxu0 0.0
        %1345 = vmatpush1.msra.mxu0 0.0
        %1346 = vmatprep.subr.mxu0 0.0
        %1347 = vmatpush1.msra.mxu0 0.0
        %1348 = vmatprep.subr.mxu0 0.0
        %1349 = vmatpush1.msra.mxu0 0.0
        %1350 = vmatprep.subr.mxu0 0.0
        %1351 = vmatpush1.msra.mxu0 0.0
        %1352 = vmatprep.subr.mxu0 0.0
        %1353 = vmatpush1.msra.mxu0 0.0
        %1354 = vmatprep.subr.mxu0 0.0
        %1355 = vmatpush1.msra.mxu0 0.0
        %1356 = vmatprep.subr.mxu0 0.0
        %1357 = vmatpush1.msra.mxu0 0.0
        %1358 = vmatprep.subr.mxu0 0.0
        %1359 = vmatpush1.msra.mxu0 0.0
        %1360 = vmatprep.subr.mxu0 0.0
        %1361 = vmatpush1.msra.mxu0 0.0
        %1362 = vmatprep.subr.mxu0 0.0
        %1363 = vmatpush1.msra.mxu0 0.0
        %1364 = vmatprep.subr.mxu0 0.0
        %1365 = vmatpush1.msra.mxu0 0.0
        %1366 = vmatprep.subr.mxu0 0.0
        %1367 = vmatpush1.msra.mxu0 0.0
        %1368 = vmatprep.subr.mxu0 0.0
        %1369 = vmatpush1.msra.mxu0 0.0
        %1370 = vmatprep.subr.mxu0 0.0
        %1371 = vmatpush1.msra.mxu0 0.0
        %1372 = vmatprep.subr.mxu0 0.0
        %1373 = vmatpush1.msra.mxu0 0.0
        %1374 = vmatprep.subr.mxu0 0.0
        %1375 = vmatpush1.msra.mxu0 0.0
        %1376 = vmatprep.subr.mxu0 0.0
        %1377 = vmatpush1.msra.mxu0 0.0
        %1378 = vmatprep.subr.mxu0 0.0
        %1379 = vmatpush1.msra.mxu0 0.0
        %1380 = vmatprep.subr.mxu0 0.0
        %1381 = vmatpush1.msra.mxu0 0.0
        %1382 = vmatprep.subr.mxu0 0.0
        %1383 = vmatpush1.msra.mxu0 0.0
        %1384 = vmatprep.subr.mxu0 0.0
        %1385 = vmatpush1.msra.mxu0 0.0
        %1386 = vmatprep.subr.mxu0 0.0
        %1387 = vmatpush1.msra.mxu0 0.0
        %1388 = vmatprep.subr.mxu0 0.0
        %1389 = vmatpush1.msra.mxu0 0.0
        %1390 = vmatprep.subr.mxu0 0.0
        %1391 = vmatpush1.msra.mxu0 0.0
        %1392 = vmatprep.subr.mxu0 0.0
        %1393 = vmatpush1.msra.mxu0 0.0
        %1394 = vmatprep.subr.mxu0 0.0
        %1395 = vmatpush1.msra.mxu0 0.0
        %1396 = vmatprep.subr.mxu0 0.0
        %1397 = vmatpush1.msra.mxu0 0.0
        %1398 = vmatprep.subr.mxu0 0.0
        %1399 = vmatpush1.msra.mxu0 0.0
        %1400 = vmatprep.subr.mxu0 0.0
        %1401 = vmatpush1.msra.mxu0 0.0
        %1402 = vmatprep.subr.mxu0 0.0
        %1403 = vmatpush1.msra.mxu0 0.0
        %1404 = vmatprep.subr.mxu0 0.0
        %1405 = vmatpush1.msra.mxu0 0.0
        %1406 = vmatprep.mubr.f32.mxu0 0.0
        %1407 = vmatmul.mubr.f32.gmra.mrb[0].mxu0 %v1337
        %v1408 = vpop.f32.mrb[0].mxu0
        %v1409 = vadd.f32 0.0, %v1408
        %v1410 = vpop.f32.mrb[0].mxu0
        %1411 = vmatprep.mubr.f32.mxu0 0.0
        %1412 = vmatmul.mubr.f32.gmra.mrb[0].mxu0 %v1340
        %v1413 = vpop.f32.mrb[0].mxu0
        %v1414 = vadd.f32 0.0, %v1413
        %v1415 = vpop.f32.mrb[0].mxu0
        %1416 = vdwg.mxu0
        %s1417 = scalar_lea.vmem %s256, 96 [#allocation3]
        %1418 = vst.msk [vmem:[%s1417] sm:$0xff] %vm433, %v1409
        %1419 = vst.msk [vmem:[%s1417 + $0x8] sm:$0xff] %vm433, %v1414
        %s1420 = scalar_lea.vmem %s236, 28 [#allocation2]
        %v1421 = vld [vmem:[%s1420] sm:$0xf]
        %v1423 = vsel %vm270, %v1421, 0
        %1425 = vmatprep.subr.mxu0 0.0
        %1426 = vmatpush1.msra.mxu0 %v1423
        %1427 = vmatprep.subr.mxu0 0.0
        %1428 = vmatpush1.msra.mxu0 0.0
        %1429 = vmatprep.subr.mxu0 0.0
        %1430 = vmatpush1.msra.mxu0 0.0
        %1431 = vmatprep.subr.mxu0 0.0
        %1432 = vmatpush1.msra.mxu0 0.0
        %1433 = vmatprep.subr.mxu0 0.0
        %1434 = vmatpush1.msra.mxu0 0.0
        %1435 = vmatprep.subr.mxu0 0.0
        %1436 = vmatpush1.msra.mxu0 0.0
        %1437 = vmatprep.subr.mxu0 0.0
        %1438 = vmatpush1.msra.mxu0 0.0
        %1439 = vmatprep.subr.mxu0 0.0
        %1440 = vmatpush1.msra.mxu0 0.0
        %1441 = vmatprep.subr.mxu0 0.0
        %1442 = vmatpush1.msra.mxu0 0.0
        %1443 = vmatprep.subr.mxu0 0.0
        %1444 = vmatpush1.msra.mxu0 0.0
        %1445 = vmatprep.subr.mxu0 0.0
        %1446 = vmatpush1.msra.mxu0 0.0
        %1447 = vmatprep.subr.mxu0 0.0
        %1448 = vmatpush1.msra.mxu0 0.0
        %1449 = vmatprep.subr.mxu0 0.0
        %1450 = vmatpush1.msra.mxu0 0.0
        %1451 = vmatprep.subr.mxu0 0.0
        %1452 = vmatpush1.msra.mxu0 0.0
        %1453 = vmatprep.subr.mxu0 0.0
        %1454 = vmatpush1.msra.mxu0 0.0
        %1455 = vmatprep.subr.mxu0 0.0
        %1456 = vmatpush1.msra.mxu0 0.0
        %1457 = vmatprep.subr.mxu0 0.0
        %1458 = vmatpush1.msra.mxu0 0.0
        %1459 = vmatprep.subr.mxu0 0.0
        %1460 = vmatpush1.msra.mxu0 0.0
        %1461 = vmatprep.subr.mxu0 0.0
        %1462 = vmatpush1.msra.mxu0 0.0
        %1463 = vmatprep.subr.mxu0 0.0
        %1464 = vmatpush1.msra.mxu0 0.0
        %1465 = vmatprep.subr.mxu0 0.0
        %1466 = vmatpush1.msra.mxu0 0.0
        %1467 = vmatprep.subr.mxu0 0.0
        %1468 = vmatpush1.msra.mxu0 0.0
        %1469 = vmatprep.subr.mxu0 0.0
        %1470 = vmatpush1.msra.mxu0 0.0
        %1471 = vmatprep.subr.mxu0 0.0
        %1472 = vmatpush1.msra.mxu0 0.0
        %1473 = vmatprep.subr.mxu0 0.0
        %1474 = vmatpush1.msra.mxu0 0.0
        %1475 = vmatprep.subr.mxu0 0.0
        %1476 = vmatpush1.msra.mxu0 0.0
        %1477 = vmatprep.subr.mxu0 0.0
        %1478 = vmatpush1.msra.mxu0 0.0
        %1479 = vmatprep.subr.mxu0 0.0
        %1480 = vmatpush1.msra.mxu0 0.0
        %1481 = vmatprep.subr.mxu0 0.0
        %1482 = vmatpush1.msra.mxu0 0.0
        %1483 = vmatprep.subr.mxu0 0.0
        %1484 = vmatpush1.msra.mxu0 0.0
        %1485 = vmatprep.subr.mxu0 0.0
        %1486 = vmatpush1.msra.mxu0 0.0
        %1487 = vmatprep.subr.mxu0 0.0
        %1488 = vmatpush1.msra.mxu0 0.0
        %1489 = vmatprep.mubr.f32.mxu0 0.0
        %1490 = vmatmul.mubr.f32.gmra.mrb[0].mxu0 %v265
        %v1491 = vpop.f32.mrb[0].mxu0
        %v1492 = vadd.f32 0.0, %v1491
        %v1493 = vpop.f32.mrb[0].mxu0
        %1494 = vmatprep.mubr.f32.mxu0 0.0
        %1495 = vmatmul.mubr.f32.gmra.mrb[0].mxu0 %v268
        %v1496 = vpop.f32.mrb[0].mxu0
        %v1497 = vadd.f32 0.0, %v1496
        %v1498 = vpop.f32.mrb[0].mxu0
        %1499 = vdwg.mxu0
        %v1501 = vsel %vm263, %v1492, 0
        %v1504 = vsel %vm263, %v1497, 0
        %1506 = vmatprep.subr.mxu0 0.0
        %1507 = vmatpush1.msra.mxu0 %v356
        %1508 = vmatprep.subr.mxu0 0.0
        %1509 = vmatpush1.msra.mxu0 0.0
        %1510 = vmatprep.subr.mxu0 0.0
        %1511 = vmatpush1.msra.mxu0 0.0
        %1512 = vmatprep.subr.mxu0 0.0
        %1513 = vmatpush1.msra.mxu0 0.0
        %1514 = vmatprep.subr.mxu0 0.0
        %1515 = vmatpush1.msra.mxu0 0.0
        %1516 = vmatprep.subr.mxu0 0.0
        %1517 = vmatpush1.msra.mxu0 0.0
        %1518 = vmatprep.subr.mxu0 0.0
        %1519 = vmatpush1.msra.mxu0 0.0
        %1520 = vmatprep.subr.mxu0 0.0
        %1521 = vmatpush1.msra.mxu0 0.0
        %1522 = vmatprep.subr.mxu0 0.0
        %1523 = vmatpush1.msra.mxu0 0.0
        %1524 = vmatprep.subr.mxu0 0.0
        %1525 = vmatpush1.msra.mxu0 0.0
        %1526 = vmatprep.subr.mxu0 0.0
        %1527 = vmatpush1.msra.mxu0 0.0
        %1528 = vmatprep.subr.mxu0 0.0
        %1529 = vmatpush1.msra.mxu0 0.0
        %1530 = vmatprep.subr.mxu0 0.0
        %1531 = vmatpush1.msra.mxu0 0.0
        %1532 = vmatprep.subr.mxu0 0.0
        %1533 = vmatpush1.msra.mxu0 0.0
        %1534 = vmatprep.subr.mxu0 0.0
        %1535 = vmatpush1.msra.mxu0 0.0
        %1536 = vmatprep.subr.mxu0 0.0
        %1537 = vmatpush1.msra.mxu0 0.0
        %1538 = vmatprep.subr.mxu0 0.0
        %1539 = vmatpush1.msra.mxu0 0.0
        %1540 = vmatprep.subr.mxu0 0.0
        %1541 = vmatpush1.msra.mxu0 0.0
        %1542 = vmatprep.subr.mxu0 0.0
        %1543 = vmatpush1.msra.mxu0 0.0
        %1544 = vmatprep.subr.mxu0 0.0
        %1545 = vmatpush1.msra.mxu0 0.0
        %1546 = vmatprep.subr.mxu0 0.0
        %1547 = vmatpush1.msra.mxu0 0.0
        %1548 = vmatprep.subr.mxu0 0.0
        %1549 = vmatpush1.msra.mxu0 0.0
        %1550 = vmatprep.subr.mxu0 0.0
        %1551 = vmatpush1.msra.mxu0 0.0
        %1552 = vmatprep.subr.mxu0 0.0
        %1553 = vmatpush1.msra.mxu0 0.0
        %1554 = vmatprep.subr.mxu0 0.0
        %1555 = vmatpush1.msra.mxu0 0.0
        %1556 = vmatprep.subr.mxu0 0.0
        %1557 = vmatpush1.msra.mxu0 0.0
        %1558 = vmatprep.subr.mxu0 0.0
        %1559 = vmatpush1.msra.mxu0 0.0
        %1560 = vmatprep.subr.mxu0 0.0
        %1561 = vmatpush1.msra.mxu0 0.0
        %1562 = vmatprep.subr.mxu0 0.0
        %1563 = vmatpush1.msra.mxu0 0.0
        %1564 = vmatprep.subr.mxu0 0.0
        %1565 = vmatpush1.msra.mxu0 0.0
        %1566 = vmatprep.subr.mxu0 0.0
        %1567 = vmatpush1.msra.mxu0 0.0
        %1568 = vmatprep.subr.mxu0 0.0
        %1569 = vmatpush1.msra.mxu0 0.0
        %1570 = vmatprep.mubr.f32.mxu0 0.0
        %1571 = vmatmul.mubr.f32.gmra.mrb[0].mxu0 %v1501
        %v1572 = vpop.f32.mrb[0].mxu0
        %v1573 = vadd.f32 0.0, %v1572
        %v1574 = vpop.f32.mrb[0].mxu0
        %1575 = vmatprep.mubr.f32.mxu0 0.0
        %1576 = vmatmul.mubr.f32.gmra.mrb[0].mxu0 %v1504
        %v1577 = vpop.f32.mrb[0].mxu0
        %v1578 = vadd.f32 0.0, %v1577
        %v1579 = vpop.f32.mrb[0].mxu0
        %1580 = vdwg.mxu0
        %s1581 = scalar_lea.vmem %s256, 112 [#allocation3]
        %1582 = vst.msk [vmem:[%s1581] sm:$0xff] %vm433, %v1573
        %1583 = vst.msk [vmem:[%s1581 + $0x8] sm:$0xff] %vm433, %v1578
        %s1584 = sand.u32 %s109, 1
        %s1585 = scalar_lea.sflag [#allocation4], %s1584
        %s1586 = sand.u32 %s109, 1
        %s1587 = smul.addr %s1586, 128
        %s1588 = scalar_lea.vmem [#allocation3], %s1587
        // Predicated region
        $region74: #{segmentation_net_forward.5} parent=68 // pred_check
          %p1589 = pneg %p119
        $region75: #{segmentation_net_forward.5} parent=68 // pred_check_branch
          %1591 = sbr.rel (%p1589) target = $region77
        $region76: #{segmentation_net_forward.5} parent=68 // pred_region
          %s1592 = smul.u32 8, %s21
          %s1594 = ssub.s32 2048, 2048
          %1595 = vsyncadd %s1585, %s1594
          %s1596 = smul.addr %s1592, 2
          %s1597 = smul.addr %s22, 16
          %s1598 = sadd.s32 %s1596, %s1597
          %s1599 = smul.addr %s1598, 128
          %s1600 = scalar_lea.hbm %s3, %s1599
          %s1601 = sshll.u32 %s1588, 4
          %s1602 = int_to_ptr.vmem [resolvable:$true] %s1601
          %1607 = dma.vmem_to_hbm [thread:$0]  %s1602, 2048, %s1600, %s1585, 128, 128, 8
        $region77: #{segmentation_net_forward.5} parent=68 // pred_fallthru
          _
      $region69: #{segmentation_net_forward.5} parent=5 // pred_fallthru
        _
      %p1608 = scmp.le.s32.totalorder 2, %s12
      // Predicated region
      $region78: #{segmentation_net_forward.5} parent=5 // pred_check
        %p1609 = pneg %p1608
      $region79: #{segmentation_net_forward.5} parent=5 // pred_check_branch
        %1611 = sbr.rel (%p1609) target = $region81
      $region80: #{segmentation_net_forward.5} parent=5 // pred_region
        %s1612 = ssub.s32 %s12, 2
        // Predicated region
        $region82: #{segmentation_net_forward.5} parent=80 // pred_check
          %p1613 = pneg %p125
        $region83: #{segmentation_net_forward.5} parent=80 // pred_check_branch
          %1615 = sbr.rel (%p1613) target = $region85
        $region84: #{segmentation_net_forward.5} parent=80 // pred_region
          %s1616 = sand.u32 %s110, 1
          %s1617 = scalar_lea.sflag [#allocation4], %s1616
          %s1618 = sand.u32 %s110, 1
          %s1619 = smul.addr %s1618, 128
          %s1620 = scalar_lea.vmem [#allocation3], %s1619
          %1621 = dma.done %s1617, 2048
        $region85: #{segmentation_net_forward.5} parent=80 // pred_fallthru
          _
      $region81: #{segmentation_net_forward.5} parent=5 // pred_fallthru
        _
    $region6: #{segmentation_net_forward.5} parent=1 // loop_footer
      %s16 = sadd.s32 1, %s12
    $region7: #{segmentation_net_forward.5} parent=1 // loop_footer_branch
      %11 = sbr.rel target = $region3
    $region8: #{segmentation_net_forward.5} parent=1 // loop_exit
      _
    %1622 = vsyncpa [#allocation4], 1
    %s1623 = scalar_lea.sflag [#allocation4], 1
    %1624 = vsyncpa %s1623, 1

</llo_original>
